<compile_context>
chip_gen: v7x
topology: tpu7x:2x2x1
jax: 0.10.0
libtpu: 0.0.40
codegen_flags: <defaults>
</compile_context>

<pallas_src>
import functools

import jax
import jax.numpy as jnp
from jax.experimental import pallas as pl
from jax.experimental.pallas import tpu as pltpu


# ----------------------------------------------------------------------------
# Kernel
# ----------------------------------------------------------------------------
def _rel_mhsa_kernel(x_ref, wqkv_ref, bqkv_ref, wm_ref, bm_ref, bias_ref, o_ref,
                     *, n_heads):
    """One grid step = `batch_tile` batch elements packed along rows.

    x_ref:    (Bt*N, Cin)             bf16  tokens of Bt batch elements, stacked
    wqkv_ref: (3*n_heads, Cin, hd)    bf16  per-(q|k|v, head) projection weights
                                            (softmax scale folded into q slabs)
    bqkv_ref: (3*n_heads, 1, hd)      f32   matching biases (scale folded into q)
    wm_ref:   (n_heads, hd, Cout_pad) bf16  merge weight split per head, 0-padded
    bm_ref:   (1, Cout_pad)           f32
    bias_ref: (Bt*N, Bt*N)            f32   block-diagonal relative-position bias;
                                            cross-batch entries are -1e9
    o_ref:    (Bt*N, Cout_pad)        f32
    """
    x = x_ref[...]                              # (Bt*N, Cin) bf16
    bias = bias_ref[...]                        # (Bt*N, Bt*N) f32
    acc = jnp.zeros(o_ref.shape, jnp.float32)   # (Bt*N, Cout_pad)

    for h in range(n_heads):                    # static unroll (n_heads small)
        q = jnp.dot(x, wqkv_ref[h],
                    preferred_element_type=jnp.float32) + bqkv_ref[h]
        k = jnp.dot(x, wqkv_ref[n_heads + h],
                    preferred_element_type=jnp.float32) + bqkv_ref[n_heads + h]
        v = jnp.dot(x, wqkv_ref[2 * n_heads + h],
                    preferred_element_type=jnp.float32) + bqkv_ref[2 * n_heads + h]

        # Scores for all Bt batch elements at once: (Bt*N, Bt*N). The
        # block-diagonal bias (-1e9 off-diagonal) removes cross-batch terms.
        s = jax.lax.dot_general(
            q.astype(jnp.bfloat16), k.astype(jnp.bfloat16),
            (((1,), (1,)), ((), ())), preferred_element_type=jnp.float32)
        s = s + bias

        # Softmax in f32 along the 128-lane-dense last axis.
        s = s - jnp.max(s, axis=-1, keepdims=True)
        p = jnp.exp(s)
        p = p * pl.reciprocal(jnp.sum(p, axis=-1, keepdims=True), approx=True)

        o_h = jnp.dot(p.astype(jnp.bfloat16), v.astype(jnp.bfloat16),
                      preferred_element_type=jnp.float32)       # (Bt*N, hd)

        # Per-head merge accumulation -> no lane-unaligned concat, no (N, dim)
        # temporary.
        acc = acc + jnp.dot(o_h.astype(jnp.bfloat16), wm_ref[h],
                            preferred_element_type=jnp.float32)

    o_ref[...] = (acc + bm_ref[...]).astype(o_ref.dtype)


# ----------------------------------------------------------------------------
# One-time parameter re-layout (constant transforms, not per-forward compute).
# ----------------------------------------------------------------------------
def get_relative_position_index(h, w):
    coords = jnp.stack(jnp.meshgrid(jnp.arange(h), jnp.arange(w),
                                    indexing="ij"))                  # (2, h, w)
    coords_flat = coords.reshape(2, -1)                              # (2, hw)
    rel = coords_flat[:, :, None] - coords_flat[:, None, :]          # (2, hw, hw)
    rel = jnp.transpose(rel, (1, 2, 0))                              # (hw, hw, 2)
    rel = rel.at[:, :, 0].add(h - 1)
    rel = rel.at[:, :, 1].add(w - 1)
    rel = rel.at[:, :, 0].multiply(2 * w - 1)
    return rel.sum(-1).reshape(-1)                                   # (hw*hw,)


def prepare_params(w_qkv, b_qkv, w_merge, b_merge, table, h, w,
                   *, n_heads, head_dim, batch_tile):
    n_tok = h * w
    c_in = w_qkv.shape[0]
    dim = n_heads * head_dim
    c_out = w_merge.shape[1]
    scale = float(dim) ** -0.5

    # (Cin, 3*dim) -> (3*n_heads, Cin, hd), scale folded into the q slabs.
    wq, wk, wv = jnp.split(w_qkv, 3, axis=1)

    def split_heads_w(wm):
        return jnp.transpose(wm.reshape(c_in, n_heads, head_dim), (1, 0, 2))

    w_qkv_h = jnp.concatenate(
        [split_heads_w(wq) * scale, split_heads_w(wk), split_heads_w(wv)],
        axis=0).astype(jnp.bfloat16)                   # (3*n_heads, Cin, hd)

    bq, bk, bv = jnp.split(b_qkv, 3)

    def split_heads_b(bv_):
        return bv_.reshape(n_heads, 1, head_dim)

    b_qkv_h = jnp.concatenate(
        [split_heads_b(bq) * scale, split_heads_b(bk), split_heads_b(bv)],
        axis=0).astype(jnp.float32)                    # (3*n_heads, 1, hd)

    # Merge weight split per head; zero-pad columns to a 128-lane-dense output.
    c_out_pad = pl.cdiv(c_out, 128) * 128
    wm_h = w_merge.reshape(n_heads, head_dim, c_out)
    wm_h = jnp.pad(wm_h, ((0, 0), (0, 0), (0, c_out_pad - c_out))
                   ).astype(jnp.bfloat16)              # (n_heads, hd, Cout_pad)
    bm = jnp.pad(b_merge, (0, c_out_pad - c_out)
                 ).reshape(1, c_out_pad).astype(jnp.float32)

    # Relative positional bias: torch.gather(table, 0, index (hw*hw,1)) only
    # reads column 0 -> the same bias for every head.
    rel_index = get_relative_position_index(h, w)
    pos_bias = table[rel_index, 0].reshape(n_tok, n_tok).astype(jnp.float32)

    # Block-diagonal bias for `batch_tile` batch elements packed into one
    # (Bt*N, Bt*N) score tile; -1e9 masks the cross-batch positions.
    btn = batch_tile * n_tok
    bias_tiled = jnp.tile(pos_bias, (batch_tile, batch_tile))
    blk = jnp.arange(btn) // n_tok
    bias_masked = jnp.where(blk[:, None] == blk[None, :], bias_tiled,
                            -1e9).astype(jnp.float32)

    return w_qkv_h, b_qkv_h, wm_h, bm, bias_masked


# ----------------------------------------------------------------------------
# pallas_call wrapper
# ----------------------------------------------------------------------------
def rel_mhsa_pallas(x, w_qkv_h, b_qkv_h, wm_h, bm, bias_masked,
                    *, n_heads, out_channels, batch_tile):
    B, N, Cin = x.shape
    assert B % batch_tile == 0, "batch must be divisible by batch_tile"
    btn = batch_tile * N
    c_out_pad = bm.shape[1]

    # Layout plumbing: flatten (B, N, Cin) -> (B*N, Cin) rows, bf16 inputs.
    x_flat = x.reshape(B * N, Cin).astype(jnp.bfloat16)

    kernel = functools.partial(_rel_mhsa_kernel, n_heads=n_heads)

    out = pl.pallas_call(
        kernel,
        out_shape=jax.ShapeDtypeStruct((B * N, c_out_pad), jnp.float32),
        grid=(B // batch_tile,),
        in_specs=[
            pl.BlockSpec((btn, Cin), lambda g: (g, 0)),            # x rows
            pl.BlockSpec(w_qkv_h.shape, lambda g: (0, 0, 0)),      # qkv weights
            pl.BlockSpec(b_qkv_h.shape, lambda g: (0, 0, 0)),      # qkv biases
            pl.BlockSpec(wm_h.shape, lambda g: (0, 0, 0)),         # merge weight
            pl.BlockSpec(bm.shape, lambda g: (0, 0)),              # merge bias
            pl.BlockSpec(bias_masked.shape, lambda g: (0, 0)),     # rel-pos bias
        ],
        out_specs=pl.BlockSpec((btn, c_out_pad), lambda g: (g, 0)),
        compiler_params=pltpu.CompilerParams(
            dimension_semantics=("parallel",)),
    )(x_flat, w_qkv_h, b_qkv_h, wm_h, bm, bias_masked)

    # Layout plumbing only: restore (B, N, C) and drop the lane padding.
    return out.reshape(B, N, c_out_pad)[:, :, :out_channels]


# ----------------------------------------------------------------------------
# Pure-JAX f32 reference (module semantics).
# ----------------------------------------------------------------------------
def pure_jax_reference(x, w_qkv, b_qkv, w_merge, b_merge, pos_bias,
                       *, n_heads, head_dim):
    B, N, _ = x.shape
    dim = n_heads * head_dim
    scale = float(dim) ** -0.5
    qkv = x @ w_qkv + b_qkv[None, None, :]
    q, k, v = jnp.split(qkv, 3, axis=-1)

    def heads(t):
        return jnp.transpose(t.reshape(B, N, n_heads, head_dim), (0, 2, 1, 3))

    q, k, v = heads(q), heads(k), heads(v)
    score = jnp.einsum("bhnd,bhmd->bhnm", q, k) * scale
    score = jax.nn.softmax(score + pos_bias[None, None], axis=-1)
    out = jnp.einsum("bhnm,bhmd->bhnd", score, v)
    out = jnp.transpose(out, (0, 2, 1, 3)).reshape(B, N, dim)
    return out @ w_merge + b_merge[None, None, :]


if __name__ == "__main__":
    # Module config: in_channels=64, out_channels=64, image=(4,4), head_dim=32
    # -> n_heads=2, dim=64, N=16. B=16 gives a 2-step "parallel" grid with
    # batch_tile=8 (128-row matmuls, both v7x TensorCores busy).
    in_channels = 64
    out_channels = 64
    h, w = 4, 4
    head_dim = 32
    n_heads = in_channels // head_dim
    dim = n_heads * head_dim
    N = h * w
    B = 16

    batch_tile = max(1, min(B, 128 // N))      # pack >=128 rows per grid step
    while B % batch_tile:
        batch_tile -= 1

    key = jax.random.PRNGKey(0)
    kx, kw1, kb1, kw2, kb2, kt = jax.random.split(key, 6)

    x = jax.random.normal(kx, (B, N, in_channels), dtype=jnp.float32)

    # Parameters (nn.Linear weights stored as (in, out)).
    w_qkv = jax.random.normal(kw1, (in_channels, 3 * dim), jnp.float32) * 0.02
    b_qkv = jax.random.normal(kb1, (3 * dim,), jnp.float32) * 0.02
    w_merge = jax.random.normal(kw2, (dim, out_channels), jnp.float32) * 0.02
    b_merge = jax.random.normal(kb2, (out_channels,), jnp.float32) * 0.02
    table = jax.random.truncated_normal(
        kt, -2.0, 2.0, ((2 * h - 1) * (2 * w - 1), n_heads), jnp.float32) * 0.02

    params = prepare_params(w_qkv, b_qkv, w_merge, b_merge, table, h, w,
                            n_heads=n_heads, head_dim=head_dim,
                            batch_tile=batch_tile)

    out = rel_mhsa_pallas(x, *params, n_heads=n_heads,
                          out_channels=out_channels, batch_tile=batch_tile)
    out = jax.block_until_ready(out)

    rel_index = get_relative_position_index(h, w)
    pos_bias = table[rel_index, 0].reshape(N, N).astype(jnp.float32)
    ref = pure_jax_reference(x, w_qkv, b_qkv, w_merge, b_merge, pos_bias,
                             n_heads=n_heads, head_dim=head_dim)

    assert out.shape == (B, N, out_channels)
    # bf16 matmul inputs with f32 accumulation vs. the pure-f32 reference:
    # tolerance covers bf16 input rounding (measured error ~1e-4 here).
    err = float(jnp.max(jnp.abs(out - ref)))
    assert jnp.allclose(out, ref, atol=2e-3, rtol=2e-3), err

    print("KERNEL_OK")
</pallas_src>

<mosaic_0001>
module attributes {stable_mosaic.version = 11 : i64} {
  func.func @_rel_mhsa_kernel(%arg0: i32, %arg1: memref<128x64xbf16, #tpu.memory_space<vmem>>, %arg2: memref<6x64x32xbf16, #tpu.memory_space<vmem>>, %arg3: memref<6x1x32xf32, #tpu.memory_space<vmem>>, %arg4: memref<2x32x128xbf16, #tpu.memory_space<vmem>>, %arg5: memref<1x128xf32, #tpu.memory_space<vmem>>, %arg6: memref<128x128xf32, #tpu.memory_space<vmem>>, %arg7: memref<128x128xf32, #tpu.memory_space<vmem>>) attributes {dimension_semantics = [#tpu.dimension_semantics<parallel>], iteration_bounds = array<i64: 2>, scalar_prefetch = 0 : i64, scratch_operands = 0 : i64, tpu.core_type = #tpu.core_type<tc>, window_params = [{transform_indices = @transform_0, window_bounds = array<i64: 128, 64>}, {pipeline_mode = #tpu.pipeline_mode<synchronous>, transform_indices = @transform_1, window_bounds = array<i64: 6, 64, 32>}, {pipeline_mode = #tpu.pipeline_mode<synchronous>, transform_indices = @transform_2, window_bounds = array<i64: 6, 1, 32>}, {pipeline_mode = #tpu.pipeline_mode<synchronous>, transform_indices = @transform_3, window_bounds = array<i64: 2, 32, 128>}, {pipeline_mode = #tpu.pipeline_mode<synchronous>, transform_indices = @transform_4, window_bounds = array<i64: 1, 128>}, {pipeline_mode = #tpu.pipeline_mode<synchronous>, transform_indices = @transform_5, window_bounds = array<i64: 128, 128>}, {transform_indices = @transform_6, window_bounds = array<i64: 128, 128>}]} {
    %c0 = arith.constant 0 : index
    %c0_0 = arith.constant 0 : index
    %0 = vector.load %arg1[%c0, %c0_0] : memref<128x64xbf16, #tpu.memory_space<vmem>>, vector<128x64xbf16>
    %c0_1 = arith.constant 0 : index
    %c0_2 = arith.constant 0 : index
    %1 = vector.load %arg6[%c0_1, %c0_2] : memref<128x128xf32, #tpu.memory_space<vmem>>, vector<128x128xf32>
    %cst = arith.constant 0.000000e+00 : f32
    %2 = vector.broadcast %cst : f32 to vector<128x128xf32>
    %c0_3 = arith.constant 0 : index
    %c0_4 = arith.constant 0 : index
    %c0_5 = arith.constant 0 : index
    %3 = vector.load %arg2[%c0_3, %c0_4, %c0_5] : memref<6x64x32xbf16, #tpu.memory_space<vmem>>, vector<1x64x32xbf16>
    %4 = vector.shape_cast %3 : vector<1x64x32xbf16> to vector<64x32xbf16>
    %cst_6 = arith.constant dense<0.000000e+00> : vector<128x32xf32>
    %5 = tpu.matmul %0, %4, %cst_6 {dimension_numbers = #tpu.dot_dimension_numbers<[1], [0], [0], [1], [0, 0, 1, 1], [], []>} : vector<128x64xbf16>, vector<64x32xbf16>, vector<128x32xf32> -> vector<128x32xf32>
    %c0_7 = arith.constant 0 : index
    %c0_8 = arith.constant 0 : index
    %c0_9 = arith.constant 0 : index
    %6 = vector.load %arg3[%c0_7, %c0_8, %c0_9] : memref<6x1x32xf32, #tpu.memory_space<vmem>>, vector<1x1x32xf32>
    %7 = vector.shape_cast %6 : vector<1x1x32xf32> to vector<1x32xf32>
    %8 = vector.broadcast %7 : vector<1x32xf32> to vector<128x32xf32>
    %9 = arith.addf %5, %8 : vector<128x32xf32>
    %c2 = arith.constant 2 : index
    %c0_10 = arith.constant 0 : index
    %c0_11 = arith.constant 0 : index
    %10 = vector.load %arg2[%c2, %c0_10, %c0_11] : memref<6x64x32xbf16, #tpu.memory_space<vmem>>, vector<1x64x32xbf16>
    %11 = vector.shape_cast %10 : vector<1x64x32xbf16> to vector<64x32xbf16>
    %cst_12 = arith.constant dense<0.000000e+00> : vector<128x32xf32>
    %12 = tpu.matmul %0, %11, %cst_12 {dimension_numbers = #tpu.dot_dimension_numbers<[1], [0], [0], [1], [0, 0, 1, 1], [], []>} : vector<128x64xbf16>, vector<64x32xbf16>, vector<128x32xf32> -> vector<128x32xf32>
    %c2_13 = arith.constant 2 : index
    %c0_14 = arith.constant 0 : index
    %c0_15 = arith.constant 0 : index
    %13 = vector.load %arg3[%c2_13, %c0_14, %c0_15] : memref<6x1x32xf32, #tpu.memory_space<vmem>>, vector<1x1x32xf32>
    %14 = vector.shape_cast %13 : vector<1x1x32xf32> to vector<1x32xf32>
    %15 = vector.broadcast %14 : vector<1x32xf32> to vector<128x32xf32>
    %16 = arith.addf %12, %15 : vector<128x32xf32>
    %c4 = arith.constant 4 : index
    %c0_16 = arith.constant 0 : index
    %c0_17 = arith.constant 0 : index
    %17 = vector.load %arg2[%c4, %c0_16, %c0_17] : memref<6x64x32xbf16, #tpu.memory_space<vmem>>, vector<1x64x32xbf16>
    %18 = vector.shape_cast %17 : vector<1x64x32xbf16> to vector<64x32xbf16>
    %cst_18 = arith.constant dense<0.000000e+00> : vector<128x32xf32>
    %19 = tpu.matmul %0, %18, %cst_18 {dimension_numbers = #tpu.dot_dimension_numbers<[1], [0], [0], [1], [0, 0, 1, 1], [], []>} : vector<128x64xbf16>, vector<64x32xbf16>, vector<128x32xf32> -> vector<128x32xf32>
    %c4_19 = arith.constant 4 : index
    %c0_20 = arith.constant 0 : index
    %c0_21 = arith.constant 0 : index
    %20 = vector.load %arg3[%c4_19, %c0_20, %c0_21] : memref<6x1x32xf32, #tpu.memory_space<vmem>>, vector<1x1x32xf32>
    %21 = vector.shape_cast %20 : vector<1x1x32xf32> to vector<1x32xf32>
    %22 = vector.broadcast %21 : vector<1x32xf32> to vector<128x32xf32>
    %23 = arith.addf %19, %22 : vector<128x32xf32>
    %24 = arith.truncf %9 : vector<128x32xf32> to vector<128x32xbf16>
    %25 = arith.truncf %16 : vector<128x32xf32> to vector<128x32xbf16>
    %cst_22 = arith.constant dense<0.000000e+00> : vector<128x128xf32>
    %26 = tpu.matmul %24, %25, %cst_22 {dimension_numbers = #tpu.dot_dimension_numbers<[1], [1], [0], [0], [0, 0, 1, 0], [], []>} : vector<128x32xbf16>, vector<128x32xbf16>, vector<128x128xf32> -> vector<128x128xf32>
    %27 = arith.addf %26, %1 : vector<128x128xf32>
    %cst_23 = arith.constant dense<0xFF800000> : vector<128xf32>
    %28 = vector.multi_reduction <maximumf>, %27, %cst_23 [1] : vector<128x128xf32> to vector<128xf32>
    %29 = vector.shape_cast %28 : vector<128xf32> to vector<128x1xf32>
    %30 = vector.broadcast %29 : vector<128x1xf32> to vector<128x128xf32>
    %31 = arith.subf %27, %30 : vector<128x128xf32>
    %32 = math.exp %31 : vector<128x128xf32>
    %cst_24 = arith.constant dense<0.000000e+00> : vector<128xf32>
    %33 = vector.multi_reduction <add>, %32, %cst_24 [1] : vector<128x128xf32> to vector<128xf32>
    %34 = vector.shape_cast %33 : vector<128xf32> to vector<128x1xf32>
    %35 = tpu.reciprocal %34 {approx = true} : vector<128x1xf32> -> vector<128x1xf32>
    %36 = vector.broadcast %35 : vector<128x1xf32> to vector<128x128xf32>
    %37 = arith.mulf %32, %36 : vector<128x128xf32>
    %38 = arith.truncf %37 : vector<128x128xf32> to vector<128x128xbf16>
    %39 = arith.truncf %23 : vector<128x32xf32> to vector<128x32xbf16>
    %cst_25 = arith.constant dense<0.000000e+00> : vector<128x32xf32>
    %40 = tpu.matmul %38, %39, %cst_25 {dimension_numbers = #tpu.dot_dimension_numbers<[1], [0], [0], [1], [0, 0, 1, 1], [], []>} : vector<128x128xbf16>, vector<128x32xbf16>, vector<128x32xf32> -> vector<128x32xf32>
    %41 = arith.truncf %40 : vector<128x32xf32> to vector<128x32xbf16>
    %c0_26 = arith.constant 0 : index
    %c0_27 = arith.constant 0 : index
    %c0_28 = arith.constant 0 : index
    %42 = vector.load %arg4[%c0_26, %c0_27, %c0_28] : memref<2x32x128xbf16, #tpu.memory_space<vmem>>, vector<1x32x128xbf16>
    %43 = vector.shape_cast %42 : vector<1x32x128xbf16> to vector<32x128xbf16>
    %cst_29 = arith.constant dense<0.000000e+00> : vector<128x128xf32>
    %44 = tpu.matmul %41, %43, %cst_29 {dimension_numbers = #tpu.dot_dimension_numbers<[1], [0], [0], [1], [0, 0, 1, 1], [], []>} : vector<128x32xbf16>, vector<32x128xbf16>, vector<128x128xf32> -> vector<128x128xf32>
    %45 = arith.addf %2, %44 : vector<128x128xf32>
    %c1 = arith.constant 1 : index
    %c0_30 = arith.constant 0 : index
    %c0_31 = arith.constant 0 : index
    %46 = vector.load %arg2[%c1, %c0_30, %c0_31] : memref<6x64x32xbf16, #tpu.memory_space<vmem>>, vector<1x64x32xbf16>
    %47 = vector.shape_cast %46 : vector<1x64x32xbf16> to vector<64x32xbf16>
    %cst_32 = arith.constant dense<0.000000e+00> : vector<128x32xf32>
    %48 = tpu.matmul %0, %47, %cst_32 {dimension_numbers = #tpu.dot_dimension_numbers<[1], [0], [0], [1], [0, 0, 1, 1], [], []>} : vector<128x64xbf16>, vector<64x32xbf16>, vector<128x32xf32> -> vector<128x32xf32>
    %c1_33 = arith.constant 1 : index
    %c0_34 = arith.constant 0 : index
    %c0_35 = arith.constant 0 : index
    %49 = vector.load %arg3[%c1_33, %c0_34, %c0_35] : memref<6x1x32xf32, #tpu.memory_space<vmem>>, vector<1x1x32xf32>
    %50 = vector.shape_cast %49 : vector<1x1x32xf32> to vector<1x32xf32>
    %51 = vector.broadcast %50 : vector<1x32xf32> to vector<128x32xf32>
    %52 = arith.addf %48, %51 : vector<128x32xf32>
    %c3 = arith.constant 3 : index
    %c0_36 = arith.constant 0 : index
    %c0_37 = arith.constant 0 : index
    %53 = vector.load %arg2[%c3, %c0_36, %c0_37] : memref<6x64x32xbf16, #tpu.memory_space<vmem>>, vector<1x64x32xbf16>
    %54 = vector.shape_cast %53 : vector<1x64x32xbf16> to vector<64x32xbf16>
    %cst_38 = arith.constant dense<0.000000e+00> : vector<128x32xf32>
    %55 = tpu.matmul %0, %54, %cst_38 {dimension_numbers = #tpu.dot_dimension_numbers<[1], [0], [0], [1], [0, 0, 1, 1], [], []>} : vector<128x64xbf16>, vector<64x32xbf16>, vector<128x32xf32> -> vector<128x32xf32>
    %c3_39 = arith.constant 3 : index
    %c0_40 = arith.constant 0 : index
    %c0_41 = arith.constant 0 : index
    %56 = vector.load %arg3[%c3_39, %c0_40, %c0_41] : memref<6x1x32xf32, #tpu.memory_space<vmem>>, vector<1x1x32xf32>
    %57 = vector.shape_cast %56 : vector<1x1x32xf32> to vector<1x32xf32>
    %58 = vector.broadcast %57 : vector<1x32xf32> to vector<128x32xf32>
    %59 = arith.addf %55, %58 : vector<128x32xf32>
    %c5 = arith.constant 5 : index
    %c0_42 = arith.constant 0 : index
    %c0_43 = arith.constant 0 : index
    %60 = vector.load %arg2[%c5, %c0_42, %c0_43] : memref<6x64x32xbf16, #tpu.memory_space<vmem>>, vector<1x64x32xbf16>
    %61 = vector.shape_cast %60 : vector<1x64x32xbf16> to vector<64x32xbf16>
    %cst_44 = arith.constant dense<0.000000e+00> : vector<128x32xf32>
    %62 = tpu.matmul %0, %61, %cst_44 {dimension_numbers = #tpu.dot_dimension_numbers<[1], [0], [0], [1], [0, 0, 1, 1], [], []>} : vector<128x64xbf16>, vector<64x32xbf16>, vector<128x32xf32> -> vector<128x32xf32>
    %c5_45 = arith.constant 5 : index
    %c0_46 = arith.constant 0 : index
    %c0_47 = arith.constant 0 : index
    %63 = vector.load %arg3[%c5_45, %c0_46, %c0_47] : memref<6x1x32xf32, #tpu.memory_space<vmem>>, vector<1x1x32xf32>
    %64 = vector.shape_cast %63 : vector<1x1x32xf32> to vector<1x32xf32>
    %65 = vector.broadcast %64 : vector<1x32xf32> to vector<128x32xf32>
    %66 = arith.addf %62, %65 : vector<128x32xf32>
    %67 = arith.truncf %52 : vector<128x32xf32> to vector<128x32xbf16>
    %68 = arith.truncf %59 : vector<128x32xf32> to vector<128x32xbf16>
    %cst_48 = arith.constant dense<0.000000e+00> : vector<128x128xf32>
    %69 = tpu.matmul %67, %68, %cst_48 {dimension_numbers = #tpu.dot_dimension_numbers<[1], [1], [0], [0], [0, 0, 1, 0], [], []>} : vector<128x32xbf16>, vector<128x32xbf16>, vector<128x128xf32> -> vector<128x128xf32>
    %70 = arith.addf %69, %1 : vector<128x128xf32>
    %cst_49 = arith.constant dense<0xFF800000> : vector<128xf32>
    %71 = vector.multi_reduction <maximumf>, %70, %cst_49 [1] : vector<128x128xf32> to vector<128xf32>
    %72 = vector.shape_cast %71 : vector<128xf32> to vector<128x1xf32>
    %73 = vector.broadcast %72 : vector<128x1xf32> to vector<128x128xf32>
    %74 = arith.subf %70, %73 : vector<128x128xf32>
    %75 = math.exp %74 : vector<128x128xf32>
    %cst_50 = arith.constant dense<0.000000e+00> : vector<128xf32>
    %76 = vector.multi_reduction <add>, %75, %cst_50 [1] : vector<128x128xf32> to vector<128xf32>
    %77 = vector.shape_cast %76 : vector<128xf32> to vector<128x1xf32>
    %78 = tpu.reciprocal %77 {approx = true} : vector<128x1xf32> -> vector<128x1xf32>
    %79 = vector.broadcast %78 : vector<128x1xf32> to vector<128x128xf32>
    %80 = arith.mulf %75, %79 : vector<128x128xf32>
    %81 = arith.truncf %80 : vector<128x128xf32> to vector<128x128xbf16>
    %82 = arith.truncf %66 : vector<128x32xf32> to vector<128x32xbf16>
    %cst_51 = arith.constant dense<0.000000e+00> : vector<128x32xf32>
    %83 = tpu.matmul %81, %82, %cst_51 {dimension_numbers = #tpu.dot_dimension_numbers<[1], [0], [0], [1], [0, 0, 1, 1], [], []>} : vector<128x128xbf16>, vector<128x32xbf16>, vector<128x32xf32> -> vector<128x32xf32>
    %84 = arith.truncf %83 : vector<128x32xf32> to vector<128x32xbf16>
    %c1_52 = arith.constant 1 : index
    %c0_53 = arith.constant 0 : index
    %c0_54 = arith.constant 0 : index
    %85 = vector.load %arg4[%c1_52, %c0_53, %c0_54] : memref<2x32x128xbf16, #tpu.memory_space<vmem>>, vector<1x32x128xbf16>
    %86 = vector.shape_cast %85 : vector<1x32x128xbf16> to vector<32x128xbf16>
    %cst_55 = arith.constant dense<0.000000e+00> : vector<128x128xf32>
    %87 = tpu.matmul %84, %86, %cst_55 {dimension_numbers = #tpu.dot_dimension_numbers<[1], [0], [0], [1], [0, 0, 1, 1], [], []>} : vector<128x32xbf16>, vector<32x128xbf16>, vector<128x128xf32> -> vector<128x128xf32>
    %88 = arith.addf %45, %87 : vector<128x128xf32>
    %c0_56 = arith.constant 0 : index
    %c0_57 = arith.constant 0 : index
    %89 = vector.load %arg5[%c0_56, %c0_57] : memref<1x128xf32, #tpu.memory_space<vmem>>, vector<1x128xf32>
    %90 = vector.broadcast %89 : vector<1x128xf32> to vector<128x128xf32>
    %91 = arith.addf %88, %90 : vector<128x128xf32>
    %c0_58 = arith.constant 0 : index
    %c0_59 = arith.constant 0 : index
    %92 = vector.load %arg7[%c0_58, %c0_59] : memref<128x128xf32, #tpu.memory_space<vmem>>, vector<128x128xf32>
    tpu.vector_store %arg7[%c0_58, %c0_59], %91 {strides = array<i32>} : memref<128x128xf32, #tpu.memory_space<vmem>>, vector<128x128xf32>,
    return
  }
  func.func @transform_0(%arg0: i32) -> (i32, i32) {
    %c0_i32 = arith.constant 0 : i32
    %c0_i32_0 = arith.constant 0 : i32
    return %arg0, %c0_i32 : i32, i32
  }
  func.func @transform_1(%arg0: i32) -> (i32, i32, i32) {
    %c0_i32 = arith.constant 0 : i32
    %c0_i32_0 = arith.constant 0 : i32
    %c0_i32_1 = arith.constant 0 : i32
    %c0_i32_2 = arith.constant 0 : i32
    return %c0_i32, %c0_i32_0, %c0_i32_1 : i32, i32, i32
  }
  func.func @transform_2(%arg0: i32) -> (i32, i32, i32) {
    %c0_i32 = arith.constant 0 : i32
    %c0_i32_0 = arith.constant 0 : i32
    %c0_i32_1 = arith.constant 0 : i32
    %c0_i32_2 = arith.constant 0 : i32
    return %c0_i32, %c0_i32_0, %c0_i32_1 : i32, i32, i32
  }
  func.func @transform_3(%arg0: i32) -> (i32, i32, i32) {
    %c0_i32 = arith.constant 0 : i32
    %c0_i32_0 = arith.constant 0 : i32
    %c0_i32_1 = arith.constant 0 : i32
    %c0_i32_2 = arith.constant 0 : i32
    return %c0_i32, %c0_i32_0, %c0_i32_1 : i32, i32, i32
  }
  func.func @transform_4(%arg0: i32) -> (i32, i32) {
    %c0_i32 = arith.constant 0 : i32
    %c0_i32_0 = arith.constant 0 : i32
    %c0_i32_1 = arith.constant 0 : i32
    return %c0_i32, %c0_i32_0 : i32, i32
  }
  func.func @transform_5(%arg0: i32) -> (i32, i32) {
    %c0_i32 = arith.constant 0 : i32
    %c0_i32_0 = arith.constant 0 : i32
    %c0_i32_1 = arith.constant 0 : i32
    return %c0_i32, %c0_i32_0 : i32, i32
  }
  func.func @transform_6(%arg0: i32) -> (i32, i32) {
    %c0_i32 = arith.constant 0 : i32
    %c0_i32_0 = arith.constant 0 : i32
    return %arg0, %c0_i32 : i32, i32
  }
}

</mosaic_0001>

<llo_original>
// kernel: tpu_custom_call.1
$region0: #{tpu_custom_call.1}
  #allocation0 [shape = 'u32[]', space=smem, size = 0x4, offset = 0x4, fixed_abs, tag = 'smem constant byte address 0x4 - core index']
  #allocation1 [shape = 'u32[144,128]{1,0:T(1,128)}', space=vmem, size = 0x12000, scoped, tag = 'internal scratch']
  %s0 = inlined_call_operand.vmem [shape: bf16[256,64], index: 0, kind: input, shape index: {}]
  %s1 = inlined_call_operand.vmem [shape: bf16[6,64,32], index: 1, kind: input, shape index: {}]
  %s2 = inlined_call_operand.vmem [shape: f32[6,1,32], index: 2, kind: input, shape index: {}]
  %s3 = inlined_call_operand.vmem [shape: bf16[2,32,128], index: 3, kind: input, shape index: {}]
  %s4 = inlined_call_operand.vmem [shape: f32[1,128], index: 4, kind: input, shape index: {}]
  %s5 = inlined_call_operand.vmem [shape: f32[128,128], index: 5, kind: input, shape index: {}]
  %s6 = inlined_call_operand.hbm [shape: f32[256,128], index: 6, kind: output, shape index: {}]
  %s7 = sld [smem:[#allocation0]]
  $region57: #{tpu_custom_call.1} parent=0
    _
  %s9 = ssub.s32 1, %s7
  %s10 = scalar_select 0, %s9, %s7
  $region1: #{tpu_custom_call.1} parent=0
    #allocation2 [shape = 'u8[131072]{0}', space=vmem, size = 0x20000, scoped, tag = 'output window, operand 0']
    #allocation3 [shape = 's32[2]{0}', space=sflag, size = 0x8, scoped, tag = 'scoped memory for tpu_custom_call.1']
    %11 = vsyncpa [#allocation3], 0
    %s12 = scalar_lea.sflag [#allocation3], 1
    %13 = vsyncpa %s12, 0
    loop: start=0, step=1, limit=4
    $region2: #{tpu_custom_call.1} parent=1 // loop_pre_header
      _
    $region3: #{tpu_custom_call.1} parent=1 // loop_header
      %s15 = sphi 0, %s19
      %p16 = scmp.ge.s32.totalorder %s15, 4
      %s25 = sphi 0, %s27
      %s28 = sphi 0, %s25
      %s29 = sphi 0, %s28
      %s45 = sphi 0, %s29
      %s49 = sphi 0, %s49
      %s51 = sphi 0, %s49
      %s52 = sphi 0, %s51
      %s66 = sphi 0, %s52
      %s70 = sphi 0, %s70
      %s72 = sphi 0, %s70
      %s73 = sphi 0, %s72
      %s87 = sphi 0, %s73
      %s91 = sphi 0, %s91
      %s93 = sphi 0, %s91
      %s94 = sphi 0, %s93
      %s108 = sphi 0, %s94
      %s112 = sphi 0, %s112
      %s114 = sphi 0, %s112
      %s115 = sphi 0, %s114
      %s129 = sphi 0, %s115
      %s133 = sphi 0, %s133
      %s135 = sphi 0, %s133
      %s136 = sphi 0, %s135
      %s150 = sphi 0, %s136
      %s156 = sphi 0, %s158
      %s159 = sphi 0, %s156
      %s160 = sphi 0, %s159
      %s176 = sphi 0, %s160
    $region4: #{tpu_custom_call.1} parent=1 // loop_header_branch
      %18 = sbr.rel (%p16) target = $region8
    $region5: #{tpu_custom_call.1} parent=1 // loop_body
      %s20 = ssub.s32 %s15, 1
      %s21 = ssub.s32 %s15, 2
      %s22 = sadd.s32 %s15, 1
      %s23 = ssub.s32 %s15, %s22
      %p24 = scmp.eq.s32.totalorder %s23, 0
      %s26 = sadd.s32 %s25, 1
      %s27 = scalar_select %p24, %s25, %s26
      %p30 = pneg %p24
      %p31 = scmp.eq.s32.totalorder %s15, 1
      %p32 = por %p30, %p31
      %p33 = scmp.ne.s32.totalorder %s25, %s28
      %p34 = scmp.eq.s32.totalorder %s15, 0
      %p35 = por %p33, %p34
      %p36 = scmp.ne.s32.totalorder %s25, %s28
      %p37 = scmp.eq.s32.totalorder %s20, 1
      %p38 = por %p36, %p37
      %p39 = scmp.ne.s32.totalorder %s28, %s29
      %p40 = scmp.eq.s32.totalorder %s20, 0
      %p41 = por %p39, %p40
      %p42 = scmp.ne.s32.totalorder %s28, %s29
      %p43 = scmp.eq.s32.totalorder %s21, 1
      %p44 = por %p42, %p43
      %p46 = scmp.ne.s32.totalorder %s29, %s45
      %p47 = scmp.eq.s32.totalorder %s21, 0
      %p48 = por %p46, %p47
      %s50 = sadd.s32 %s49, 1
      %p53 = scmp.eq.s32.totalorder %s15, 1
      %p54 = scmp.ne.s32.totalorder %s49, %s51
      %p55 = scmp.eq.s32.totalorder %s15, 0
      %p56 = por %p54, %p55
      %p57 = scmp.ne.s32.totalorder %s49, %s51
      %p58 = scmp.eq.s32.totalorder %s20, 1
      %p59 = por %p57, %p58
      %p60 = scmp.ne.s32.totalorder %s51, %s52
      %p61 = scmp.eq.s32.totalorder %s20, 0
      %p62 = por %p60, %p61
      %p63 = scmp.ne.s32.totalorder %s51, %s52
      %p64 = scmp.eq.s32.totalorder %s21, 1
      %p65 = por %p63, %p64
      %p67 = scmp.ne.s32.totalorder %s52, %s66
      %p68 = scmp.eq.s32.totalorder %s21, 0
      %p69 = por %p67, %p68
      %s71 = sadd.s32 %s70, 1
      %p74 = scmp.eq.s32.totalorder %s15, 1
      %p75 = scmp.ne.s32.totalorder %s70, %s72
      %p76 = scmp.eq.s32.totalorder %s15, 0
      %p77 = por %p75, %p76
      %p78 = scmp.ne.s32.totalorder %s70, %s72
      %p79 = scmp.eq.s32.totalorder %s20, 1
      %p80 = por %p78, %p79
      %p81 = scmp.ne.s32.totalorder %s72, %s73
      %p82 = scmp.eq.s32.totalorder %s20, 0
      %p83 = por %p81, %p82
      %p84 = scmp.ne.s32.totalorder %s72, %s73
      %p85 = scmp.eq.s32.totalorder %s21, 1
      %p86 = por %p84, %p85
      %p88 = scmp.ne.s32.totalorder %s73, %s87
      %p89 = scmp.eq.s32.totalorder %s21, 0
      %p90 = por %p88, %p89
      %s92 = sadd.s32 %s91, 1
      %p95 = scmp.eq.s32.totalorder %s15, 1
      %p96 = scmp.ne.s32.totalorder %s91, %s93
      %p97 = scmp.eq.s32.totalorder %s15, 0
      %p98 = por %p96, %p97
      %p99 = scmp.ne.s32.totalorder %s91, %s93
      %p100 = scmp.eq.s32.totalorder %s20, 1
      %p101 = por %p99, %p100
      %p102 = scmp.ne.s32.totalorder %s93, %s94
      %p103 = scmp.eq.s32.totalorder %s20, 0
      %p104 = por %p102, %p103
      %p105 = scmp.ne.s32.totalorder %s93, %s94
      %p106 = scmp.eq.s32.totalorder %s21, 1
      %p107 = por %p105, %p106
      %p109 = scmp.ne.s32.totalorder %s94, %s108
      %p110 = scmp.eq.s32.totalorder %s21, 0
      %p111 = por %p109, %p110
      %s113 = sadd.s32 %s112, 1
      %p116 = scmp.eq.s32.totalorder %s15, 1
      %p117 = scmp.ne.s32.totalorder %s112, %s114
      %p118 = scmp.eq.s32.totalorder %s15, 0
      %p119 = por %p117, %p118
      %p120 = scmp.ne.s32.totalorder %s112, %s114
      %p121 = scmp.eq.s32.totalorder %s20, 1
      %p122 = por %p120, %p121
      %p123 = scmp.ne.s32.totalorder %s114, %s115
      %p124 = scmp.eq.s32.totalorder %s20, 0
      %p125 = por %p123, %p124
      %p126 = scmp.ne.s32.totalorder %s114, %s115
      %p127 = scmp.eq.s32.totalorder %s21, 1
      %p128 = por %p126, %p127
      %p130 = scmp.ne.s32.totalorder %s115, %s129
      %p131 = scmp.eq.s32.totalorder %s21, 0
      %p132 = por %p130, %p131
      %s134 = sadd.s32 %s133, 1
      %p137 = scmp.eq.s32.totalorder %s15, 1
      %p138 = scmp.ne.s32.totalorder %s133, %s135
      %p139 = scmp.eq.s32.totalorder %s15, 0
      %p140 = por %p138, %p139
      %p141 = scmp.ne.s32.totalorder %s133, %s135
      %p142 = scmp.eq.s32.totalorder %s20, 1
      %p143 = por %p141, %p142
      %p144 = scmp.ne.s32.totalorder %s135, %s136
      %p145 = scmp.eq.s32.totalorder %s20, 0
      %p146 = por %p144, %p145
      %p147 = scmp.ne.s32.totalorder %s135, %s136
      %p148 = scmp.eq.s32.totalorder %s21, 1
      %p149 = por %p147, %p148
      %p151 = scmp.ne.s32.totalorder %s136, %s150
      %p152 = scmp.eq.s32.totalorder %s21, 0
      %p153 = por %p151, %p152
      %s154 = ssub.s32 %s15, %s22
      %p155 = scmp.eq.s32.totalorder %s154, 0
      %s157 = sadd.s32 %s156, 1
      %s158 = scalar_select %p155, %s156, %s157
      %p161 = pneg %p155
      %p162 = scmp.eq.s32.totalorder %s15, 1
      %p163 = por %p161, %p162
      %p164 = scmp.ne.s32.totalorder %s156, %s159
      %p165 = scmp.eq.s32.totalorder %s15, 0
      %p166 = por %p164, %p165
      %p167 = scmp.ne.s32.totalorder %s156, %s159
      %p168 = scmp.eq.s32.totalorder %s20, 1
      %p169 = por %p167, %p168
      %p170 = scmp.ne.s32.totalorder %s159, %s160
      %p171 = scmp.eq.s32.totalorder %s20, 0
      %p172 = por %p170, %p171
      %p173 = scmp.ne.s32.totalorder %s159, %s160
      %p174 = scmp.eq.s32.totalorder %s21, 1
      %p175 = por %p173, %p174
      %p177 = scmp.ne.s32.totalorder %s160, %s176
      %p178 = scmp.eq.s32.totalorder %s21, 0
      %p179 = por %p177, %p178
      %p180 = scmp.le.s32.totalorder 1, %s15
      %p181 = scmp.lt.s32.totalorder %s15, 3
      %p182 = pnand %p180, %p181
      %p183 = pneg %p182
      // Predicated region
      $region9: #{tpu_custom_call.1} parent=5 // pred_check
        _
      $region10: #{tpu_custom_call.1} parent=5 // pred_check_branch
        %185 = sbr.rel (%p182) target = $region12
      $region11: #{tpu_custom_call.1} parent=5 // pred_region
        %s186 = ssub.s32 %s15, 1
        // Predicated region
        $region13: #{tpu_custom_call.1} parent=11 // pred_check
          %p187 = pneg %p62
        $region14: #{tpu_custom_call.1} parent=11 // pred_check_branch
          %189 = sbr.rel (%p187) target = $region16
        $region15: #{tpu_custom_call.1} parent=11 // pred_region
          _
        $region16: #{tpu_custom_call.1} parent=11 // pred_fallthru
          _
        // Predicated region
        $region17: #{tpu_custom_call.1} parent=11 // pred_check
          %p190 = pneg %p83
        $region18: #{tpu_custom_call.1} parent=11 // pred_check_branch
          %192 = sbr.rel (%p190) target = $region20
        $region19: #{tpu_custom_call.1} parent=11 // pred_region
          _
        $region20: #{tpu_custom_call.1} parent=11 // pred_fallthru
          _
        // Predicated region
        $region21: #{tpu_custom_call.1} parent=11 // pred_check
          %p193 = pneg %p104
        $region22: #{tpu_custom_call.1} parent=11 // pred_check_branch
          %195 = sbr.rel (%p193) target = $region24
        $region23: #{tpu_custom_call.1} parent=11 // pred_region
          _
        $region24: #{tpu_custom_call.1} parent=11 // pred_fallthru
          _
        // Predicated region
        $region25: #{tpu_custom_call.1} parent=11 // pred_check
          %p196 = pneg %p125
        $region26: #{tpu_custom_call.1} parent=11 // pred_check_branch
          %198 = sbr.rel (%p196) target = $region28
        $region27: #{tpu_custom_call.1} parent=11 // pred_region
          _
        $region28: #{tpu_custom_call.1} parent=11 // pred_fallthru
          _
        // Predicated region
        $region29: #{tpu_custom_call.1} parent=11 // pred_check
          %p199 = pneg %p146
        $region30: #{tpu_custom_call.1} parent=11 // pred_check_branch
          %201 = sbr.rel (%p199) target = $region32
        $region31: #{tpu_custom_call.1} parent=11 // pred_region
          _
        $region32: #{tpu_custom_call.1} parent=11 // pred_fallthru
          _
      $region12: #{tpu_custom_call.1} parent=5 // pred_fallthru
        _
      %p202 = scmp.lt.s32.totalorder %s15, 2
      // Predicated region
      $region33: #{tpu_custom_call.1} parent=5 // pred_check
        %p203 = pneg %p202
      $region34: #{tpu_custom_call.1} parent=5 // pred_check_branch
        %205 = sbr.rel (%p203) target = $region36
      $region35: #{tpu_custom_call.1} parent=5 // pred_region
        // Predicated region
        $region37: #{tpu_custom_call.1} parent=35 // pred_check
          %p206 = pneg %p35
        $region38: #{tpu_custom_call.1} parent=35 // pred_check_branch
          %208 = sbr.rel (%p206) target = $region40
        $region39: #{tpu_custom_call.1} parent=35 // pred_region
          %s209 = smul.u32 16, %s15
          %p210 = scmp.lt.s32.totalorder %s209, 31
          %s211 = scalar_select %p210, %s209, 31
          %s212 = smul.addr %s211, 4
          %s213 = scalar_lea.vmem %s0, %s212
          %s214 = smul.u32 16, %s15
        $region40: #{tpu_custom_call.1} parent=35 // pred_fallthru
          _
      $region36: #{tpu_custom_call.1} parent=5 // pred_fallthru
        _
      %p215 = scmp.le.s32.totalorder 1, %s15
      %p216 = scmp.lt.s32.totalorder %s15, 3
      %p217 = pnand %p215, %p216
      %p218 = pneg %p217
      // Predicated region
      $region41: #{tpu_custom_call.1} parent=5 // pred_check
        _
      $region42: #{tpu_custom_call.1} parent=5 // pred_check_branch
        %220 = sbr.rel (%p217) target = $region44
      $region43: #{tpu_custom_call.1} parent=5 // pred_region
        %s221 = ssub.s32 %s15, 1
        %s222 = smul.u32 16, %s20
        %p223 = scmp.lt.s32.totalorder %s222, 31
        %s224 = scalar_select %p223, %s222, 31
        %s225 = smul.addr %s224, 4
        %s226 = scalar_lea.vmem %s0, %s225
        %p227 = pneg %p41
        %p228 = pneg %p38
        %p229 = pneg %p62
        %p230 = pneg %p59
        %p231 = pneg %p83
        %p232 = pneg %p80
        %p233 = pneg %p104
        %p234 = pneg %p101
        %p235 = pneg %p125
        %p236 = pneg %p122
        %p237 = pneg %p146
        %p238 = pneg %p143
        %p239 = pneg %p172
        %p240 = pneg %p169
        %s241 = sand.u32 %s159, 1
        %s242 = scalar_lea.sflag [#allocation3], %s241
        %s243 = sand.u32 %s159, 1
        %s244 = smul.addr %s243, 128
        %s245 = scalar_lea.vmem [#allocation2], %s244
        %s246 = smul.u32 16, %s20
        %p247 = scmp.lt.s32.totalorder %s246, 31
        %s248 = scalar_select %p247, %s246, 31
        %s249 = smul.addr %s248, 4
        %s250 = scalar_lea.vmem %s0, %s249
        %s251 = smul.u32 16, %s20
        %s252 = smul.u32 16, %s20
        %v254 = vld [vmem:[%s250] sm:$0xf]
        %v255 = vld [vmem:[%s250 + $0x4] sm:$0xf]
        %v256 = vld [vmem:[%s250 + $0x8] sm:$0xf]
        %v257 = vld [vmem:[%s250 + $0xc] sm:$0xf]
        %v258 = vld [vmem:[%s250 + $0x10] sm:$0xf]
        %v259 = vld [vmem:[%s250 + $0x14] sm:$0xf]
        %v260 = vld [vmem:[%s250 + $0x18] sm:$0xf]
        %v261 = vld [vmem:[%s250 + $0x1c] sm:$0xf]
        %v262 = vld [vmem:[%s250 + $0x20] sm:$0xf]
        %v263 = vld [vmem:[%s250 + $0x24] sm:$0xf]
        %v264 = vld [vmem:[%s250 + $0x28] sm:$0xf]
        %v265 = vld [vmem:[%s250 + $0x2c] sm:$0xf]
        %v266 = vld [vmem:[%s250 + $0x30] sm:$0xf]
        %v267 = vld [vmem:[%s250 + $0x34] sm:$0xf]
        %v268 = vld [vmem:[%s250 + $0x38] sm:$0xf]
        %v269 = vld [vmem:[%s250 + $0x3c] sm:$0xf]
        %v270 = vld [vmem:[%s5] sm:$0xff]
        %v271 = vld [vmem:[%s5 + $0x8] sm:$0xff]
        %v272 = vld [vmem:[%s5 + $0x10] sm:$0xff]
        %v273 = vld [vmem:[%s5 + $0x18] sm:$0xff]
        %v274 = vld [vmem:[%s5 + $0x20] sm:$0xff]
        %v275 = vld [vmem:[%s5 + $0x28] sm:$0xff]
        %v276 = vld [vmem:[%s5 + $0x30] sm:$0xff]
        %v277 = vld [vmem:[%s5 + $0x38] sm:$0xff]
        %v278 = vld [vmem:[%s5 + $0x40] sm:$0xff]
        %v279 = vld [vmem:[%s5 + $0x48] sm:$0xff]
        %v280 = vld [vmem:[%s5 + $0x50] sm:$0xff]
        %v281 = vld [vmem:[%s5 + $0x58] sm:$0xff]
        %v282 = vld [vmem:[%s5 + $0x60] sm:$0xff]
        %v283 = vld [vmem:[%s5 + $0x68] sm:$0xff]
        %v284 = vld [vmem:[%s5 + $0x70] sm:$0xff]
        %v285 = vld [vmem:[%s5 + $0x78] sm:$0xff]
        %v286 = vld [vmem:[%s1] sm:$0xf]
        %v287 = vld [vmem:[%s1 + $0x4] sm:$0xf]
        %v288 = vld [vmem:[%s1 + $0x8] sm:$0xf]
        %v289 = vld [vmem:[%s1 + $0xc] sm:$0xf]
        %v290 = vld [vmem:[%s1 + $0x10] sm:$0xf]
        %v291 = vld [vmem:[%s1 + $0x14] sm:$0xf]
        %v292 = vld [vmem:[%s1 + $0x18] sm:$0xf]
        %v293 = vld [vmem:[%s1 + $0x1c] sm:$0xf]
        %v294 = vld [vmem:[%s2] sm:$0x1]
        %v296 = vlaneseq
        %v297 = vshrl.u32 %v296, 7
        %v298 = vsub.s32 0, %v297
        %v299 = vrot.slane %v294, %v298
        %v317 = vunpack.c.l.b16 %v254
        %v318 = vunpack.c.l.b16 %v255
        %v319 = vunpack.c.l.b16 %v256
        %v320 = vunpack.c.l.b16 %v257
        %v321 = vunpack.c.l.b16 %v258
        %v322 = vunpack.c.l.b16 %v259
        %v323 = vunpack.c.l.b16 %v260
        %v324 = vunpack.c.l.b16 %v261
        %v325 = vunpack.c.l.b16 %v262
        %v326 = vunpack.c.l.b16 %v263
        %v327 = vunpack.c.l.b16 %v264
        %v328 = vunpack.c.l.b16 %v265
        %v329 = vunpack.c.l.b16 %v266
        %v330 = vunpack.c.l.b16 %v267
        %v331 = vunpack.c.l.b16 %v268
        %v332 = vunpack.c.l.b16 %v269
        %v333 = vpack.c.b16 %v318, %v317
        %v334 = vpack.c.b16 %v320, %v319
        %v335 = vpack.c.b16 %v322, %v321
        %v336 = vpack.c.b16 %v324, %v323
        %v337 = vpack.c.b16 %v326, %v325
        %v338 = vpack.c.b16 %v328, %v327
        %v339 = vpack.c.b16 %v330, %v329
        %v340 = vpack.c.b16 %v332, %v331
        %v349 = vunpack.c.l.b16 %v286
        %v350 = vunpack.c.l.b16 %v287
        %v351 = vunpack.c.l.b16 %v288
        %v352 = vunpack.c.l.b16 %v289
        %v353 = vunpack.c.l.b16 %v290
        %v354 = vunpack.c.l.b16 %v291
        %v355 = vunpack.c.l.b16 %v292
        %v356 = vunpack.c.l.b16 %v293
        %v357 = vpack.c.b16 %v350, %v349
        %v358 = vpack.c.b16 %v352, %v351
        %v359 = vpack.c.b16 %v354, %v353
        %v360 = vpack.c.b16 %v356, %v355
        %vm365 = vcmask 523264
        %v367 = vsel %vm365, %v333, 0
        %v370 = vsel %vm365, %v334, 0
        %v373 = vsel %vm365, %v335, 0
        %v376 = vsel %vm365, %v336, 0
        %v379 = vsel %vm365, %v337, 0
        %v382 = vsel %vm365, %v338, 0
        %v385 = vsel %vm365, %v339, 0
        %v388 = vsel %vm365, %v340, 0
        %390 = vmatprep.subr.bf16.mxu0 0
        %391 = vmatpush1.bf16.msra.mxu0 %v357
        %392 = vmatprep.subr.bf16.mxu0 0
        %393 = vmatpush1.bf16.msra.mxu0 %v358
        %394 = vmatprep.subr.bf16.mxu0 0
        %395 = vmatpush1.bf16.msra.mxu0 %v359
        %396 = vmatprep.subr.bf16.mxu0 0
        %397 = vmatpush1.bf16.msra.mxu0 %v360
        %398 = vmatprep.subr.bf16.mxu0 0
        %399 = vmatpush1.bf16.msra.mxu0 0
        %400 = vmatprep.subr.bf16.mxu0 0
        %401 = vmatpush1.bf16.msra.mxu0 0
        %402 = vmatprep.subr.bf16.mxu0 0
        %403 = vmatpush1.bf16.msra.mxu0 0
        %404 = vmatprep.subr.bf16.mxu0 0
        %405 = vmatpush1.bf16.msra.mxu0 0
        %406 = vmatprep.subr.bf16.mxu0 0
        %407 = vmatpush1.bf16.msra.mxu0 0
        %408 = vmatprep.subr.bf16.mxu0 0
        %409 = vmatpush1.bf16.msra.mxu0 0
        %410 = vmatprep.subr.bf16.mxu0 0
        %411 = vmatpush1.bf16.msra.mxu0 0
        %412 = vmatprep.subr.bf16.mxu0 0
        %413 = vmatpush1.bf16.msra.mxu0 0
        %414 = vmatprep.subr.bf16.mxu0 0
        %415 = vmatpush1.bf16.msra.mxu0 0
        %416 = vmatprep.subr.bf16.mxu0 0
        %417 = vmatpush1.bf16.msra.mxu0 0
        %418 = vmatprep.subr.bf16.mxu0 0
        %419 = vmatpush1.bf16.msra.mxu0 0
        %420 = vmatprep.subr.bf16.mxu0 0
        %421 = vmatpush1.bf16.msra.mxu0 0
        %422 = vmatprep.mubr.bf16.mxu0 0
        %423 = vmatmul.mubr.bf16.gmra.mrb[0].mxu0 %v367
        %v424 = vpop.f32.mrb[0].mxu0
        %v425 = vadd.f32 %v299, %v424
        %v426 = vpop.f32.mrb[0].mxu0
        %v427 = vpop.f32.mrb[0].mxu0
        %v428 = vadd.f32 %v299, %v427
        %v429 = vpop.f32.mrb[0].mxu0
        %430 = vmatprep.mubr.bf16.mxu0 0
        %431 = vmatmul.mubr.bf16.gmra.mrb[0].mxu0 %v370
        %v432 = vpop.f32.mrb[0].mxu0
        %v433 = vadd.f32 %v299, %v432
        %v434 = vpop.f32.mrb[0].mxu0
        %v435 = vpop.f32.mrb[0].mxu0
        %v436 = vadd.f32 %v299, %v435
        %v437 = vpop.f32.mrb[0].mxu0
        %438 = vmatprep.mubr.bf16.mxu0 0
        %439 = vmatmul.mubr.bf16.gmra.mrb[0].mxu0 %v373
        %v440 = vpop.f32.mrb[0].mxu0
        %v441 = vadd.f32 %v299, %v440
        %v442 = vpop.f32.mrb[0].mxu0
        %v443 = vpop.f32.mrb[0].mxu0
        %v444 = vadd.f32 %v299, %v443
        %v445 = vpop.f32.mrb[0].mxu0
        %446 = vmatprep.mubr.bf16.mxu0 0
        %447 = vmatmul.mubr.bf16.gmra.mrb[0].mxu0 %v376
        %v448 = vpop.f32.mrb[0].mxu0
        %v449 = vadd.f32 %v299, %v448
        %v450 = vpop.f32.mrb[0].mxu0
        %v451 = vpop.f32.mrb[0].mxu0
        %v452 = vadd.f32 %v299, %v451
        %v453 = vpop.f32.mrb[0].mxu0
        %454 = vmatprep.mubr.bf16.mxu0 0
        %455 = vmatmul.mubr.bf16.gmra.mrb[0].mxu0 %v379
        %v456 = vpop.f32.mrb[0].mxu0
        %v457 = vadd.f32 %v299, %v456
        %v458 = vpop.f32.mrb[0].mxu0
        %v459 = vpop.f32.mrb[0].mxu0
        %v460 = vadd.f32 %v299, %v459
        %v461 = vpop.f32.mrb[0].mxu0
        %462 = vmatprep.mubr.bf16.mxu0 0
        %463 = vmatmul.mubr.bf16.gmra.mrb[0].mxu0 %v382
        %v464 = vpop.f32.mrb[0].mxu0
        %v465 = vadd.f32 %v299, %v464
        %v466 = vpop.f32.mrb[0].mxu0
        %v467 = vpop.f32.mrb[0].mxu0
        %v468 = vadd.f32 %v299, %v467
        %v469 = vpop.f32.mrb[0].mxu0
        %470 = vmatprep.mubr.bf16.mxu0 0
        %471 = vmatmul.mubr.bf16.gmra.mrb[0].mxu0 %v385
        %v472 = vpop.f32.mrb[0].mxu0
        %v473 = vadd.f32 %v299, %v472
        %v474 = vpop.f32.mrb[0].mxu0
        %v475 = vpop.f32.mrb[0].mxu0
        %v476 = vadd.f32 %v299, %v475
        %v477 = vpop.f32.mrb[0].mxu0
        %478 = vmatprep.mubr.bf16.mxu0 0
        %479 = vmatmul.mubr.bf16.gmra.mrb[0].mxu0 %v388
        %v480 = vpop.f32.mrb[0].mxu0
        %v481 = vadd.f32 %v299, %v480
        %v482 = vpop.f32.mrb[0].mxu0
        %v483 = vpop.f32.mrb[0].mxu0
        %v484 = vadd.f32 %v299, %v483
        %v485 = vpop.f32.mrb[0].mxu0
        %486 = vdwg.mxu0
        %s487 = scalar_lea.vmem %s1, 64
        %v488 = vld [vmem:[%s487] sm:$0xf]
        %v489 = vld [vmem:[%s487 + $0x4] sm:$0xf]
        %v490 = vld [vmem:[%s487 + $0x8] sm:$0xf]
        %v491 = vld [vmem:[%s487 + $0xc] sm:$0xf]
        %v492 = vld [vmem:[%s487 + $0x10] sm:$0xf]
        %v493 = vld [vmem:[%s487 + $0x14] sm:$0xf]
        %v494 = vld [vmem:[%s487 + $0x18] sm:$0xf]
        %v495 = vld [vmem:[%s487 + $0x1c] sm:$0xf]
        %s496 = scalar_lea.vmem %s2, 2
        %v497 = vld [vmem:[%s496] sm:$0x1]
        %v499 = vlaneseq
        %v500 = vshrl.u32 %v499, 7
        %v501 = vsub.s32 0, %v500
        %v502 = vrot.slane %v497, %v501
        %v512 = vunpack.c.l.b16 %v488
        %v513 = vunpack.c.l.b16 %v489
        %v514 = vunpack.c.l.b16 %v490
        %v515 = vunpack.c.l.b16 %v491
        %v516 = vunpack.c.l.b16 %v492
        %v517 = vunpack.c.l.b16 %v493
        %v518 = vunpack.c.l.b16 %v494
        %v519 = vunpack.c.l.b16 %v495
        %v520 = vpack.c.b16 %v513, %v512
        %v521 = vpack.c.b16 %v515, %v514
        %v522 = vpack.c.b16 %v517, %v516
        %v523 = vpack.c.b16 %v519, %v518
        %528 = vmatprep.subr.bf16.mxu0 0
        %529 = vmatpush1.bf16.msra.mxu0 %v520
        %530 = vmatprep.subr.bf16.mxu0 0
        %531 = vmatpush1.bf16.msra.mxu0 %v521
        %532 = vmatprep.subr.bf16.mxu0 0
        %533 = vmatpush1.bf16.msra.mxu0 %v522
        %534 = vmatprep.subr.bf16.mxu0 0
        %535 = vmatpush1.bf16.msra.mxu0 %v523
        %536 = vmatprep.subr.bf16.mxu0 0
        %537 = vmatpush1.bf16.msra.mxu0 0
        %538 = vmatprep.subr.bf16.mxu0 0
        %539 = vmatpush1.bf16.msra.mxu0 0
        %540 = vmatprep.subr.bf16.mxu0 0
        %541 = vmatpush1.bf16.msra.mxu0 0
        %542 = vmatprep.subr.bf16.mxu0 0
        %543 = vmatpush1.bf16.msra.mxu0 0
        %544 = vmatprep.subr.bf16.mxu0 0
        %545 = vmatpush1.bf16.msra.mxu0 0
        %546 = vmatprep.subr.bf16.mxu0 0
        %547 = vmatpush1.bf16.msra.mxu0 0
        %548 = vmatprep.subr.bf16.mxu0 0
        %549 = vmatpush1.bf16.msra.mxu0 0
        %550 = vmatprep.subr.bf16.mxu0 0
        %551 = vmatpush1.bf16.msra.mxu0 0
        %552 = vmatprep.subr.bf16.mxu0 0
        %553 = vmatpush1.bf16.msra.mxu0 0
        %554 = vmatprep.subr.bf16.mxu0 0
        %555 = vmatpush1.bf16.msra.mxu0 0
        %556 = vmatprep.subr.bf16.mxu0 0
        %557 = vmatpush1.bf16.msra.mxu0 0
        %558 = vmatprep.subr.bf16.mxu0 0
        %559 = vmatpush1.bf16.msra.mxu0 0
        %560 = vmatprep.mubr.bf16.mxu0 0
        %561 = vmatmul.mubr.bf16.gmra.mrb[0].mxu0 %v367
        %v562 = vpop.f32.mrb[0].mxu0
        %v563 = vadd.f32 %v502, %v562
        %v564 = vpop.f32.mrb[0].mxu0
        %v565 = vpop.f32.mrb[0].mxu0
        %v566 = vadd.f32 %v502, %v565
        %v567 = vpop.f32.mrb[0].mxu0
        %568 = vmatprep.mubr.bf16.mxu0 0
        %569 = vmatmul.mubr.bf16.gmra.mrb[0].mxu0 %v370
        %v570 = vpop.f32.mrb[0].mxu0
        %v571 = vadd.f32 %v502, %v570
        %v572 = vpop.f32.mrb[0].mxu0
        %v573 = vpop.f32.mrb[0].mxu0
        %v574 = vadd.f32 %v502, %v573
        %v575 = vpop.f32.mrb[0].mxu0
        %576 = vmatprep.mubr.bf16.mxu0 0
        %577 = vmatmul.mubr.bf16.gmra.mrb[0].mxu0 %v373
        %v578 = vpop.f32.mrb[0].mxu0
        %v579 = vadd.f32 %v502, %v578
        %v580 = vpop.f32.mrb[0].mxu0
        %v581 = vpop.f32.mrb[0].mxu0
        %v582 = vadd.f32 %v502, %v581
        %v583 = vpop.f32.mrb[0].mxu0
        %584 = vmatprep.mubr.bf16.mxu0 0
        %585 = vmatmul.mubr.bf16.gmra.mrb[0].mxu0 %v376
        %v586 = vpop.f32.mrb[0].mxu0
        %v587 = vadd.f32 %v502, %v586
        %v588 = vpop.f32.mrb[0].mxu0
        %v589 = vpop.f32.mrb[0].mxu0
        %v590 = vadd.f32 %v502, %v589
        %v591 = vpop.f32.mrb[0].mxu0
        %592 = vmatprep.mubr.bf16.mxu0 0
        %593 = vmatmul.mubr.bf16.gmra.mrb[0].mxu0 %v379
        %v594 = vpop.f32.mrb[0].mxu0
        %v595 = vadd.f32 %v502, %v594
        %v596 = vpop.f32.mrb[0].mxu0
        %v597 = vpop.f32.mrb[0].mxu0
        %v598 = vadd.f32 %v502, %v597
        %v599 = vpop.f32.mrb[0].mxu0
        %600 = vmatprep.mubr.bf16.mxu0 0
        %601 = vmatmul.mubr.bf16.gmra.mrb[0].mxu0 %v382
        %v602 = vpop.f32.mrb[0].mxu0
        %v603 = vadd.f32 %v502, %v602
        %v604 = vpop.f32.mrb[0].mxu0
        %v605 = vpop.f32.mrb[0].mxu0
        %v606 = vadd.f32 %v502, %v605
        %v607 = vpop.f32.mrb[0].mxu0
        %608 = vmatprep.mubr.bf16.mxu0 0
        %609 = vmatmul.mubr.bf16.gmra.mrb[0].mxu0 %v385
        %v610 = vpop.f32.mrb[0].mxu0
        %v611 = vadd.f32 %v502, %v610
        %v612 = vpop.f32.mrb[0].mxu0
        %v613 = vpop.f32.mrb[0].mxu0
        %v614 = vadd.f32 %v502, %v613
        %v615 = vpop.f32.mrb[0].mxu0
        %616 = vmatprep.mubr.bf16.mxu0 0
        %617 = vmatmul.mubr.bf16.gmra.mrb[0].mxu0 %v388
        %v618 = vpop.f32.mrb[0].mxu0
        %v619 = vadd.f32 %v502, %v618
        %v620 = vpop.f32.mrb[0].mxu0
        %v621 = vpop.f32.mrb[0].mxu0
        %v622 = vadd.f32 %v502, %v621
        %v623 = vpop.f32.mrb[0].mxu0
        %624 = vdwg.mxu0
        %s625 = scalar_lea.vmem %s1, 128
        %v626 = vld [vmem:[%s625] sm:$0xf]
        %v627 = vld [vmem:[%s625 + $0x4] sm:$0xf]
        %v628 = vld [vmem:[%s625 + $0x8] sm:$0xf]
        %v629 = vld [vmem:[%s625 + $0xc] sm:$0xf]
        %v630 = vld [vmem:[%s625 + $0x10] sm:$0xf]
        %v631 = vld [vmem:[%s625 + $0x14] sm:$0xf]
        %v632 = vld [vmem:[%s625 + $0x18] sm:$0xf]
        %v633 = vld [vmem:[%s625 + $0x1c] sm:$0xf]
        %s634 = scalar_lea.vmem %s2, 4
        %v635 = vld [vmem:[%s634] sm:$0x1]
        %v637 = vlaneseq
        %v638 = vshrl.u32 %v637, 7
        %v639 = vsub.s32 0, %v638
        %v640 = vrot.slane %v635, %v639
        %v650 = vunpack.c.l.b16 %v626
        %v651 = vunpack.c.l.b16 %v627
        %v652 = vunpack.c.l.b16 %v628
        %v653 = vunpack.c.l.b16 %v629
        %v654 = vunpack.c.l.b16 %v630
        %v655 = vunpack.c.l.b16 %v631
        %v656 = vunpack.c.l.b16 %v632
        %v657 = vunpack.c.l.b16 %v633
        %v658 = vpack.c.b16 %v651, %v650
        %v659 = vpack.c.b16 %v653, %v652
        %v660 = vpack.c.b16 %v655, %v654
        %v661 = vpack.c.b16 %v657, %v656
        %666 = vmatprep.subr.bf16.mxu0 0
        %667 = vmatpush1.bf16.msra.mxu0 %v658
        %668 = vmatprep.subr.bf16.mxu0 0
        %669 = vmatpush1.bf16.msra.mxu0 %v659
        %670 = vmatprep.subr.bf16.mxu0 0
        %671 = vmatpush1.bf16.msra.mxu0 %v660
        %672 = vmatprep.subr.bf16.mxu0 0
        %673 = vmatpush1.bf16.msra.mxu0 %v661
        %674 = vmatprep.subr.bf16.mxu0 0
        %675 = vmatpush1.bf16.msra.mxu0 0
        %676 = vmatprep.subr.bf16.mxu0 0
        %677 = vmatpush1.bf16.msra.mxu0 0
        %678 = vmatprep.subr.bf16.mxu0 0
        %679 = vmatpush1.bf16.msra.mxu0 0
        %680 = vmatprep.subr.bf16.mxu0 0
        %681 = vmatpush1.bf16.msra.mxu0 0
        %682 = vmatprep.subr.bf16.mxu0 0
        %683 = vmatpush1.bf16.msra.mxu0 0
        %684 = vmatprep.subr.bf16.mxu0 0
        %685 = vmatpush1.bf16.msra.mxu0 0
        %686 = vmatprep.subr.bf16.mxu0 0
        %687 = vmatpush1.bf16.msra.mxu0 0
        %688 = vmatprep.subr.bf16.mxu0 0
        %689 = vmatpush1.bf16.msra.mxu0 0
        %690 = vmatprep.subr.bf16.mxu0 0
        %691 = vmatpush1.bf16.msra.mxu0 0
        %692 = vmatprep.subr.bf16.mxu0 0
        %693 = vmatpush1.bf16.msra.mxu0 0
        %694 = vmatprep.subr.bf16.mxu0 0
        %695 = vmatpush1.bf16.msra.mxu0 0
        %696 = vmatprep.subr.bf16.mxu0 0
        %697 = vmatpush1.bf16.msra.mxu0 0
        %698 = vmatprep.mubr.bf16.mxu0 0
        %699 = vmatmul.mubr.bf16.gmra.mrb[0].mxu0 %v367
        %v700 = vpop.f32.mrb[0].mxu0
        %v701 = vadd.f32 %v640, %v700
        %v702 = vpop.f32.mrb[0].mxu0
        %v703 = vpop.f32.mrb[0].mxu0
        %v704 = vadd.f32 %v640, %v703
        %v705 = vpop.f32.mrb[0].mxu0
        %706 = vmatprep.mubr.bf16.mxu0 0
        %707 = vmatmul.mubr.bf16.gmra.mrb[0].mxu0 %v370
        %v708 = vpop.f32.mrb[0].mxu0
        %v709 = vadd.f32 %v640, %v708
        %v710 = vpop.f32.mrb[0].mxu0
        %v711 = vpop.f32.mrb[0].mxu0
        %v712 = vadd.f32 %v640, %v711
        %v713 = vpop.f32.mrb[0].mxu0
        %714 = vmatprep.mubr.bf16.mxu0 0
        %715 = vmatmul.mubr.bf16.gmra.mrb[0].mxu0 %v373
        %v716 = vpop.f32.mrb[0].mxu0
        %v717 = vadd.f32 %v640, %v716
        %v718 = vpop.f32.mrb[0].mxu0
        %v719 = vpop.f32.mrb[0].mxu0
        %v720 = vadd.f32 %v640, %v719
        %v721 = vpop.f32.mrb[0].mxu0
        %722 = vmatprep.mubr.bf16.mxu0 0
        %723 = vmatmul.mubr.bf16.gmra.mrb[0].mxu0 %v376
        %v724 = vpop.f32.mrb[0].mxu0
        %v725 = vadd.f32 %v640, %v724
        %v726 = vpop.f32.mrb[0].mxu0
        %v727 = vpop.f32.mrb[0].mxu0
        %v728 = vadd.f32 %v640, %v727
        %v729 = vpop.f32.mrb[0].mxu0
        %730 = vmatprep.mubr.bf16.mxu0 0
        %731 = vmatmul.mubr.bf16.gmra.mrb[0].mxu0 %v379
        %v732 = vpop.f32.mrb[0].mxu0
        %v733 = vadd.f32 %v640, %v732
        %v734 = vpop.f32.mrb[0].mxu0
        %v735 = vpop.f32.mrb[0].mxu0
        %v736 = vadd.f32 %v640, %v735
        %v737 = vpop.f32.mrb[0].mxu0
        %738 = vmatprep.mubr.bf16.mxu0 0
        %739 = vmatmul.mubr.bf16.gmra.mrb[0].mxu0 %v382
        %v740 = vpop.f32.mrb[0].mxu0
        %v741 = vadd.f32 %v640, %v740
        %v742 = vpop.f32.mrb[0].mxu0
        %v743 = vpop.f32.mrb[0].mxu0
        %v744 = vadd.f32 %v640, %v743
        %v745 = vpop.f32.mrb[0].mxu0
        %746 = vmatprep.mubr.bf16.mxu0 0
        %747 = vmatmul.mubr.bf16.gmra.mrb[0].mxu0 %v385
        %v748 = vpop.f32.mrb[0].mxu0
        %v749 = vadd.f32 %v640, %v748
        %v750 = vpop.f32.mrb[0].mxu0
        %v751 = vpop.f32.mrb[0].mxu0
        %v752 = vadd.f32 %v640, %v751
        %v753 = vpop.f32.mrb[0].mxu0
        %754 = vmatprep.mubr.bf16.mxu0 0
        %755 = vmatmul.mubr.bf16.gmra.mrb[0].mxu0 %v388
        %v756 = vpop.f32.mrb[0].mxu0
        %v757 = vadd.f32 %v640, %v756
        %v758 = vpop.f32.mrb[0].mxu0
        %v759 = vpop.f32.mrb[0].mxu0
        %v760 = vadd.f32 %v640, %v759
        %v761 = vpop.f32.mrb[0].mxu0
        %762 = vdwg.mxu0
        %v763 = vpack.c.bf16 %v428, %v425
        %v764 = vpack.c.bf16 %v436, %v433
        %v765 = vpack.c.bf16 %v444, %v441
        %v766 = vpack.c.bf16 %v452, %v449
        %v767 = vpack.c.bf16 %v460, %v457
        %v768 = vpack.c.bf16 %v468, %v465
        %v769 = vpack.c.bf16 %v476, %v473
        %v770 = vpack.c.bf16 %v484, %v481
        %v771 = vpack.c.bf16 %v566, %v563
        %v772 = vpack.c.bf16 %v574, %v571
        %v773 = vpack.c.bf16 %v582, %v579
        %v774 = vpack.c.bf16 %v590, %v587
        %v775 = vpack.c.bf16 %v598, %v595
        %v776 = vpack.c.bf16 %v606, %v603
        %v777 = vpack.c.bf16 %v614, %v611
        %v778 = vpack.c.bf16 %v622, %v619
        %vm779 = vcmask 261120
        %v781 = vsel %vm779, %v763, 0
        %v784 = vsel %vm779, %v764, 0
        %v787 = vsel %vm779, %v765, 0
        %v790 = vsel %vm779, %v766, 0
        %v793 = vsel %vm779, %v767, 0
        %v796 = vsel %vm779, %v768, 0
        %v799 = vsel %vm779, %v769, 0
        %v802 = vsel %vm779, %v770, 0
        %v805 = vsel %vm779, %v771, 0
        %v808 = vsel %vm779, %v772, 0
        %v811 = vsel %vm779, %v773, 0
        %v814 = vsel %vm779, %v774, 0
        %v817 = vsel %vm779, %v775, 0
        %v820 = vsel %vm779, %v776, 0
        %v823 = vsel %vm779, %v777, 0
        %v826 = vsel %vm779, %v778, 0
        %828 = vmatprep.subr.bf16.mxu0 0
        %829 = vmatpush1.bf16.xpose.msra.mxu0 %v805
        %830 = vmatprep.subr.bf16.mxu0 0
        %831 = vmatpush1.bf16.xpose.msra.mxu0 %v808
        %832 = vmatprep.subr.bf16.mxu0 0
        %833 = vmatpush1.bf16.xpose.msra.mxu0 %v811
        %834 = vmatprep.subr.bf16.mxu0 0
        %835 = vmatpush1.bf16.xpose.msra.mxu0 %v814
        %836 = vmatprep.subr.bf16.mxu0 0
        %837 = vmatpush1.bf16.xpose.msra.mxu0 %v817
        %838 = vmatprep.subr.bf16.mxu0 0
        %839 = vmatpush1.bf16.xpose.msra.mxu0 %v820
        %840 = vmatprep.subr.bf16.mxu0 0
        %841 = vmatpush1.bf16.xpose.msra.mxu0 %v823
        %842 = vmatprep.subr.bf16.mxu0 0
        %843 = vmatpush1.bf16.xpose.msra.mxu0 %v826
        %844 = vmatprep.subr.bf16.mxu0 0
        %845 = vmatpush1.bf16.xpose.msra.mxu0 0
        %846 = vmatprep.subr.bf16.mxu0 0
        %847 = vmatpush1.bf16.xpose.msra.mxu0 0
        %848 = vmatprep.subr.bf16.mxu0 0
        %849 = vmatpush1.bf16.xpose.msra.mxu0 0
        %850 = vmatprep.subr.bf16.mxu0 0
        %851 = vmatpush1.bf16.xpose.msra.mxu0 0
        %852 = vmatprep.subr.bf16.mxu0 0
        %853 = vmatpush1.bf16.xpose.msra.mxu0 0
        %854 = vmatprep.subr.bf16.mxu0 0
        %855 = vmatpush1.bf16.xpose.msra.mxu0 0
        %856 = vmatprep.subr.bf16.mxu0 0
        %857 = vmatpush1.bf16.xpose.msra.mxu0 0
        %858 = vmatprep.subr.bf16.mxu0 0
        %859 = vmatpush1.bf16.xpose.msra.mxu0 0
        %860 = vmatprep.mubr.bf16.mxu0 0
        %861 = vmatmul.mubr.bf16.gmra.mrb[0].mxu0 %v781
        %v862 = vpop.f32.mrb[0].mxu0
        %v863 = vadd.f32 %v270, %v862
        %v864 = vpop.f32.mrb[0].mxu0
        %v865 = vpop.f32.mrb[0].mxu0
        %v866 = vadd.f32 %v271, %v865
        %v867 = vpop.f32.mrb[0].mxu0
        %868 = vmatprep.mubr.bf16.mxu0 0
        %869 = vmatmul.mubr.bf16.gmra.mrb[0].mxu0 %v784
        %v870 = vpop.f32.mrb[0].mxu0
        %v871 = vadd.f32 %v272, %v870
        %v872 = vpop.f32.mrb[0].mxu0
        %v873 = vpop.f32.mrb[0].mxu0
        %v874 = vadd.f32 %v273, %v873
        %v875 = vpop.f32.mrb[0].mxu0
        %876 = vmatprep.mubr.bf16.mxu0 0
        %877 = vmatmul.mubr.bf16.gmra.mrb[0].mxu0 %v787
        %v878 = vpop.f32.mrb[0].mxu0
        %v879 = vadd.f32 %v274, %v878
        %v880 = vpop.f32.mrb[0].mxu0
        %v881 = vpop.f32.mrb[0].mxu0
        %v882 = vadd.f32 %v275, %v881
        %v883 = vpop.f32.mrb[0].mxu0
        %884 = vmatprep.mubr.bf16.mxu0 0
        %885 = vmatmul.mubr.bf16.gmra.mrb[0].mxu0 %v790
        %v886 = vpop.f32.mrb[0].mxu0
        %v887 = vadd.f32 %v276, %v886
        %v888 = vpop.f32.mrb[0].mxu0
        %v889 = vpop.f32.mrb[0].mxu0
        %v890 = vadd.f32 %v277, %v889
        %v891 = vpop.f32.mrb[0].mxu0
        %892 = vmatprep.mubr.bf16.mxu0 0
        %893 = vmatmul.mubr.bf16.gmra.mrb[0].mxu0 %v793
        %v894 = vpop.f32.mrb[0].mxu0
        %v895 = vadd.f32 %v278, %v894
        %v896 = vpop.f32.mrb[0].mxu0
        %v897 = vpop.f32.mrb[0].mxu0
        %v898 = vadd.f32 %v279, %v897
        %v899 = vpop.f32.mrb[0].mxu0
        %900 = vmatprep.mubr.bf16.mxu0 0
        %901 = vmatmul.mubr.bf16.gmra.mrb[0].mxu0 %v796
        %v902 = vpop.f32.mrb[0].mxu0
        %v903 = vadd.f32 %v280, %v902
        %v904 = vpop.f32.mrb[0].mxu0
        %v905 = vpop.f32.mrb[0].mxu0
        %v906 = vadd.f32 %v281, %v905
        %v907 = vpop.f32.mrb[0].mxu0
        %908 = vmatprep.mubr.bf16.mxu0 0
        %909 = vmatmul.mubr.bf16.gmra.mrb[0].mxu0 %v799
        %v910 = vpop.f32.mrb[0].mxu0
        %v911 = vadd.f32 %v282, %v910
        %v912 = vpop.f32.mrb[0].mxu0
        %v913 = vpop.f32.mrb[0].mxu0
        %v914 = vadd.f32 %v283, %v913
        %v915 = vpop.f32.mrb[0].mxu0
        %916 = vmatprep.mubr.bf16.mxu0 0
        %917 = vmatmul.mubr.bf16.gmra.mrb[0].mxu0 %v802
        %v918 = vpop.f32.mrb[0].mxu0
        %v919 = vadd.f32 %v284, %v918
        %v920 = vpop.f32.mrb[0].mxu0
        %v921 = vpop.f32.mrb[0].mxu0
        %v922 = vadd.f32 %v285, %v921
        %v923 = vpop.f32.mrb[0].mxu0
        %924 = vdwg.mxu0
        %925 = vmax.xlane.f32.xlu0 %v863
        %v926 = vpop.xlane.xlu0 %925
        %927 = vmax.xlane.f32.xlu0 %v866
        %v928 = vpop.xlane.xlu0 %927
        %929 = vmax.xlane.f32.xlu0 %v871
        %v930 = vpop.xlane.xlu0 %929
        %931 = vmax.xlane.f32.xlu0 %v874
        %v932 = vpop.xlane.xlu0 %931
        %933 = vmax.xlane.f32.xlu0 %v879
        %v934 = vpop.xlane.xlu0 %933
        %935 = vmax.xlane.f32.xlu0 %v882
        %v936 = vpop.xlane.xlu0 %935
        %937 = vmax.xlane.f32.xlu0 %v887
        %v938 = vpop.xlane.xlu0 %937
        %939 = vmax.xlane.f32.xlu0 %v890
        %v940 = vpop.xlane.xlu0 %939
        %941 = vmax.xlane.f32.xlu0 %v895
        %v942 = vpop.xlane.xlu0 %941
        %943 = vmax.xlane.f32.xlu0 %v898
        %v944 = vpop.xlane.xlu0 %943
        %945 = vmax.xlane.f32.xlu0 %v903
        %v946 = vpop.xlane.xlu0 %945
        %947 = vmax.xlane.f32.xlu0 %v906
        %v948 = vpop.xlane.xlu0 %947
        %949 = vmax.xlane.f32.xlu0 %v911
        %v950 = vpop.xlane.xlu0 %949
        %951 = vmax.xlane.f32.xlu0 %v914
        %v952 = vpop.xlane.xlu0 %951
        %953 = vmax.xlane.f32.xlu0 %v919
        %v954 = vpop.xlane.xlu0 %953
        %955 = vmax.xlane.f32.xlu0 %v922
        %v956 = vpop.xlane.xlu0 %955
        %v957 = vsub.f32 %v863, %v926
        %v958 = vsub.f32 %v866, %v928
        %v959 = vsub.f32 %v871, %v930
        %v960 = vsub.f32 %v874, %v932
        %v961 = vsub.f32 %v879, %v934
        %v962 = vsub.f32 %v882, %v936
        %v963 = vsub.f32 %v887, %v938
        %v964 = vsub.f32 %v890, %v940
        %v965 = vsub.f32 %v895, %v942
        %v966 = vsub.f32 %v898, %v944
        %v967 = vsub.f32 %v903, %v946
        %v968 = vsub.f32 %v906, %v948
        %v969 = vsub.f32 %v911, %v950
        %v970 = vsub.f32 %v914, %v952
        %v971 = vsub.f32 %v919, %v954
        %v972 = vsub.f32 %v922, %v956
        %v973 = vmul.f32 %v957, 1.442695
        %v974 = vpow.pop %v973
        %v975 = vmul.f32 %v958, 1.442695
        %v976 = vpow.pop %v975
        %v977 = vmul.f32 %v959, 1.442695
        %v978 = vpow.pop %v977
        %v979 = vmul.f32 %v960, 1.442695
        %v980 = vpow.pop %v979
        %v981 = vmul.f32 %v961, 1.442695
        %v982 = vpow.pop %v981
        %v983 = vmul.f32 %v962, 1.442695
        %v984 = vpow.pop %v983
        %v985 = vmul.f32 %v963, 1.442695
        %v986 = vpow.pop %v985
        %v987 = vmul.f32 %v964, 1.442695
        %v988 = vpow.pop %v987
        %v989 = vmul.f32 %v965, 1.442695
        %v990 = vpow.pop %v989
        %v991 = vmul.f32 %v966, 1.442695
        %v992 = vpow.pop %v991
        %v993 = vmul.f32 %v967, 1.442695
        %v994 = vpow.pop %v993
        %v995 = vmul.f32 %v968, 1.442695
        %v996 = vpow.pop %v995
        %v997 = vmul.f32 %v969, 1.442695
        %v998 = vpow.pop %v997
        %v999 = vmul.f32 %v970, 1.442695
        %v1000 = vpow.pop %v999
        %v1001 = vmul.f32 %v971, 1.442695
        %v1002 = vpow.pop %v1001
        %v1003 = vmul.f32 %v972, 1.442695
        %v1004 = vpow.pop %v1003
        %1005 = vadd.xlane.f32.xlu0 %v974
        %v1006 = vpop.xlane.xlu0 %1005
        %1007 = vadd.xlane.f32.xlu0 %v976
        %v1008 = vpop.xlane.xlu0 %1007
        %1009 = vadd.xlane.f32.xlu0 %v978
        %v1010 = vpop.xlane.xlu0 %1009
        %1011 = vadd.xlane.f32.xlu0 %v980
        %v1012 = vpop.xlane.xlu0 %1011
        %1013 = vadd.xlane.f32.xlu0 %v982
        %v1014 = vpop.xlane.xlu0 %1013
        %1015 = vadd.xlane.f32.xlu0 %v984
        %v1016 = vpop.xlane.xlu0 %1015
        %1017 = vadd.xlane.f32.xlu0 %v986
        %v1018 = vpop.xlane.xlu0 %1017
        %1019 = vadd.xlane.f32.xlu0 %v988
        %v1020 = vpop.xlane.xlu0 %1019
        %1021 = vadd.xlane.f32.xlu0 %v990
        %v1022 = vpop.xlane.xlu0 %1021
        %1023 = vadd.xlane.f32.xlu0 %v992
        %v1024 = vpop.xlane.xlu0 %1023
        %1025 = vadd.xlane.f32.xlu0 %v994
        %v1026 = vpop.xlane.xlu0 %1025
        %1027 = vadd.xlane.f32.xlu0 %v996
        %v1028 = vpop.xlane.xlu0 %1027
        %1029 = vadd.xlane.f32.xlu0 %v998
        %v1030 = vpop.xlane.xlu0 %1029
        %1031 = vadd.xlane.f32.xlu0 %v1000
        %v1032 = vpop.xlane.xlu0 %1031
        %1033 = vadd.xlane.f32.xlu0 %v1002
        %v1034 = vpop.xlane.xlu0 %1033
        %1035 = vadd.xlane.f32.xlu0 %v1004
        %v1036 = vpop.xlane.xlu0 %1035
        %v1037 = vrcp.pop %v1006
        %v1038 = vrcp.pop %v1008
        %v1039 = vrcp.pop %v1010
        %v1040 = vrcp.pop %v1012
        %v1041 = vrcp.pop %v1014
        %v1042 = vrcp.pop %v1016
        %v1043 = vrcp.pop %v1018
        %v1044 = vrcp.pop %v1020
        %v1045 = vrcp.pop %v1022
        %v1046 = vrcp.pop %v1024
        %v1047 = vrcp.pop %v1026
        %v1048 = vrcp.pop %v1028
        %v1049 = vrcp.pop %v1030
        %v1050 = vrcp.pop %v1032
        %v1051 = vrcp.pop %v1034
        %v1052 = vrcp.pop %v1036
        %v1053 = vmul.f32 %v974, %v1037
        %v1054 = vmul.f32 %v976, %v1038
        %v1055 = vmul.f32 %v978, %v1039
        %v1056 = vmul.f32 %v980, %v1040
        %v1057 = vmul.f32 %v982, %v1041
        %v1058 = vmul.f32 %v984, %v1042
        %v1059 = vmul.f32 %v986, %v1043
        %v1060 = vmul.f32 %v988, %v1044
        %v1061 = vmul.f32 %v990, %v1045
        %v1062 = vmul.f32 %v992, %v1046
        %v1063 = vmul.f32 %v994, %v1047
        %v1064 = vmul.f32 %v996, %v1048
        %v1065 = vmul.f32 %v998, %v1049
        %v1066 = vmul.f32 %v1000, %v1050
        %v1067 = vmul.f32 %v1002, %v1051
        %v1068 = vmul.f32 %v1004, %v1052
        %v1069 = vpack.c.bf16 %v1054, %v1053
        %v1070 = vpack.c.bf16 %v1056, %v1055
        %v1071 = vpack.c.bf16 %v1058, %v1057
        %v1072 = vpack.c.bf16 %v1060, %v1059
        %v1073 = vpack.c.bf16 %v1062, %v1061
        %v1074 = vpack.c.bf16 %v1064, %v1063
        %v1075 = vpack.c.bf16 %v1066, %v1065
        %v1076 = vpack.c.bf16 %v1068, %v1067
        %v1077 = vpack.c.bf16 %v704, %v701
        %v1078 = vpack.c.bf16 %v712, %v709
        %v1079 = vpack.c.bf16 %v720, %v717
        %v1080 = vpack.c.bf16 %v728, %v725
        %v1081 = vpack.c.bf16 %v736, %v733
        %v1082 = vpack.c.bf16 %v744, %v741
        %v1083 = vpack.c.bf16 %v752, %v749
        %v1084 = vpack.c.bf16 %v760, %v757
        %1085 = vmatprep.subr.bf16.mxu0 0
        %1086 = vmatpush1.bf16.msra.mxu0 %v1077
        %1087 = vmatprep.subr.bf16.mxu0 0
        %1088 = vmatpush1.bf16.msra.mxu0 %v1078
        %1089 = vmatprep.subr.bf16.mxu0 0
        %1090 = vmatpush1.bf16.msra.mxu0 %v1079
        %1091 = vmatprep.subr.bf16.mxu0 0
        %1092 = vmatpush1.bf16.msra.mxu0 %v1080
        %1093 = vmatprep.subr.bf16.mxu0 0
        %1094 = vmatpush1.bf16.msra.mxu0 %v1081
        %1095 = vmatprep.subr.bf16.mxu0 0
        %1096 = vmatpush1.bf16.msra.mxu0 %v1082
        %1097 = vmatprep.subr.bf16.mxu0 0
        %1098 = vmatpush1.bf16.msra.mxu0 %v1083
        %1099 = vmatprep.subr.bf16.mxu0 0
        %1100 = vmatpush1.bf16.msra.mxu0 %v1084
        %1101 = vmatprep.subr.bf16.mxu0 0
        %1102 = vmatpush1.bf16.msra.mxu0 0
        %1103 = vmatprep.subr.bf16.mxu0 0
        %1104 = vmatpush1.bf16.msra.mxu0 0
        %1105 = vmatprep.subr.bf16.mxu0 0
        %1106 = vmatpush1.bf16.msra.mxu0 0
        %1107 = vmatprep.subr.bf16.mxu0 0
        %1108 = vmatpush1.bf16.msra.mxu0 0
        %1109 = vmatprep.subr.bf16.mxu0 0
        %1110 = vmatpush1.bf16.msra.mxu0 0
        %1111 = vmatprep.subr.bf16.mxu0 0
        %1112 = vmatpush1.bf16.msra.mxu0 0
        %1113 = vmatprep.subr.bf16.mxu0 0
        %1114 = vmatpush1.bf16.msra.mxu0 0
        %1115 = vmatprep.subr.bf16.mxu0 0
        %1116 = vmatpush1.bf16.msra.mxu0 0
        %1117 = vmatprep.mubr.bf16.mxu0 0
        %1118 = vmatmul.mubr.bf16.gmra.mrb[0].mxu0 %v1069
        %v1119 = vpop.f32.mrb[0].mxu0
        %v1120 = vadd.f32 0.0, %v1119
        %v1121 = vpop.f32.mrb[0].mxu0
        %v1122 = vpop.f32.mrb[0].mxu0
        %v1123 = vadd.f32 0.0, %v1122
        %v1124 = vpop.f32.mrb[0].mxu0
        %1125 = vmatprep.mubr.bf16.mxu0 0
        %1126 = vmatmul.mubr.bf16.gmra.mrb[0].mxu0 %v1070
        %v1127 = vpop.f32.mrb[0].mxu0
        %v1128 = vadd.f32 0.0, %v1127
        %v1129 = vpop.f32.mrb[0].mxu0
        %v1130 = vpop.f32.mrb[0].mxu0
        %v1131 = vadd.f32 0.0, %v1130
        %v1132 = vpop.f32.mrb[0].mxu0
        %1133 = vmatprep.mubr.bf16.mxu0 0
        %1134 = vmatmul.mubr.bf16.gmra.mrb[0].mxu0 %v1071
        %v1135 = vpop.f32.mrb[0].mxu0
        %v1136 = vadd.f32 0.0, %v1135
        %v1137 = vpop.f32.mrb[0].mxu0
        %v1138 = vpop.f32.mrb[0].mxu0
        %v1139 = vadd.f32 0.0, %v1138
        %v1140 = vpop.f32.mrb[0].mxu0
        %1141 = vmatprep.mubr.bf16.mxu0 0
        %1142 = vmatmul.mubr.bf16.gmra.mrb[0].mxu0 %v1072
        %v1143 = vpop.f32.mrb[0].mxu0
        %v1144 = vadd.f32 0.0, %v1143
        %v1145 = vpop.f32.mrb[0].mxu0
        %v1146 = vpop.f32.mrb[0].mxu0
        %v1147 = vadd.f32 0.0, %v1146
        %v1148 = vpop.f32.mrb[0].mxu0
        %1149 = vmatprep.mubr.bf16.mxu0 0
        %1150 = vmatmul.mubr.bf16.gmra.mrb[0].mxu0 %v1073
        %v1151 = vpop.f32.mrb[0].mxu0
        %v1152 = vadd.f32 0.0, %v1151
        %v1153 = vpop.f32.mrb[0].mxu0
        %v1154 = vpop.f32.mrb[0].mxu0
        %v1155 = vadd.f32 0.0, %v1154
        %v1156 = vpop.f32.mrb[0].mxu0
        %1157 = vmatprep.mubr.bf16.mxu0 0
        %1158 = vmatmul.mubr.bf16.gmra.mrb[0].mxu0 %v1074
        %v1159 = vpop.f32.mrb[0].mxu0
        %v1160 = vadd.f32 0.0, %v1159
        %v1161 = vpop.f32.mrb[0].mxu0
        %v1162 = vpop.f32.mrb[0].mxu0
        %v1163 = vadd.f32 0.0, %v1162
        %v1164 = vpop.f32.mrb[0].mxu0
        %1165 = vmatprep.mubr.bf16.mxu0 0
        %1166 = vmatmul.mubr.bf16.gmra.mrb[0].mxu0 %v1075
        %v1167 = vpop.f32.mrb[0].mxu0
        %v1168 = vadd.f32 0.0, %v1167
        %v1169 = vpop.f32.mrb[0].mxu0
        %v1170 = vpop.f32.mrb[0].mxu0
        %v1171 = vadd.f32 0.0, %v1170
        %v1172 = vpop.f32.mrb[0].mxu0
        %1173 = vmatprep.mubr.bf16.mxu0 0
        %1174 = vmatmul.mubr.bf16.gmra.mrb[0].mxu0 %v1076
        %v1175 = vpop.f32.mrb[0].mxu0
        %v1176 = vadd.f32 0.0, %v1175
        %v1177 = vpop.f32.mrb[0].mxu0
        %v1178 = vpop.f32.mrb[0].mxu0
        %v1179 = vadd.f32 0.0, %v1178
        %v1180 = vpop.f32.mrb[0].mxu0
        %1181 = vdwg.mxu0
        %v1182 = vpack.c.bf16 %v1123, %v1120
        %v1183 = vpack.c.bf16 %v1131, %v1128
        %v1184 = vpack.c.bf16 %v1139, %v1136
        %v1185 = vpack.c.bf16 %v1147, %v1144
        %v1186 = vpack.c.bf16 %v1155, %v1152
        %v1187 = vpack.c.bf16 %v1163, %v1160
        %v1188 = vpack.c.bf16 %v1171, %v1168
        %v1189 = vpack.c.bf16 %v1179, %v1176
        %v1190 = vld [vmem:[%s3] sm:$0xf]
        %v1191 = vld [vmem:[%s3 + $0x4] sm:$0xf]
        %v1192 = vld [vmem:[%s3 + $0x8] sm:$0xf]
        %v1193 = vld [vmem:[%s3 + $0xc] sm:$0xf]
        %s1194 = scalar_lea.vmem %s1, 32
        %v1195 = vld [vmem:[%s1194] sm:$0xf]
        %v1196 = vld [vmem:[%s1194 + $0x4] sm:$0xf]
        %v1197 = vld [vmem:[%s1194 + $0x8] sm:$0xf]
        %v1198 = vld [vmem:[%s1194 + $0xc] sm:$0xf]
        %v1199 = vld [vmem:[%s1194 + $0x10] sm:$0xf]
        %v1200 = vld [vmem:[%s1194 + $0x14] sm:$0xf]
        %v1201 = vld [vmem:[%s1194 + $0x18] sm:$0xf]
        %v1202 = vld [vmem:[%s1194 + $0x1c] sm:$0xf]
        %s1203 = scalar_lea.vmem %s2, 1
        %v1204 = vld [vmem:[%s1203] sm:$0x1]
        %v1206 = vlaneseq
        %v1207 = vshrl.u32 %v1206, 7
        %v1208 = vsub.s32 0, %v1207
        %v1209 = vrot.slane %v1204, %v1208
        %v1219 = vunpack.c.l.b16 %v1195
        %v1220 = vunpack.c.l.b16 %v1196
        %v1221 = vunpack.c.l.b16 %v1197
        %v1222 = vunpack.c.l.b16 %v1198
        %v1223 = vunpack.c.l.b16 %v1199
        %v1224 = vunpack.c.l.b16 %v1200
        %v1225 = vunpack.c.l.b16 %v1201
        %v1226 = vunpack.c.l.b16 %v1202
        %v1227 = vpack.c.b16 %v1220, %v1219
        %v1228 = vpack.c.b16 %v1222, %v1221
        %v1229 = vpack.c.b16 %v1224, %v1223
        %v1230 = vpack.c.b16 %v1226, %v1225
        %1235 = vmatprep.subr.bf16.mxu0 0
        %1236 = vmatpush1.bf16.msra.mxu0 %v1227
        %1237 = vmatprep.subr.bf16.mxu0 0
        %1238 = vmatpush1.bf16.msra.mxu0 %v1228
        %1239 = vmatprep.subr.bf16.mxu0 0
        %1240 = vmatpush1.bf16.msra.mxu0 %v1229
        %1241 = vmatprep.subr.bf16.mxu0 0
        %1242 = vmatpush1.bf16.msra.mxu0 %v1230
        %1243 = vmatprep.subr.bf16.mxu0 0
        %1244 = vmatpush1.bf16.msra.mxu0 0
        %1245 = vmatprep.subr.bf16.mxu0 0
        %1246 = vmatpush1.bf16.msra.mxu0 0
        %1247 = vmatprep.subr.bf16.mxu0 0
        %1248 = vmatpush1.bf16.msra.mxu0 0
        %1249 = vmatprep.subr.bf16.mxu0 0
        %1250 = vmatpush1.bf16.msra.mxu0 0
        %1251 = vmatprep.subr.bf16.mxu0 0
        %1252 = vmatpush1.bf16.msra.mxu0 0
        %1253 = vmatprep.subr.bf16.mxu0 0
        %1254 = vmatpush1.bf16.msra.mxu0 0
        %1255 = vmatprep.subr.bf16.mxu0 0
        %1256 = vmatpush1.bf16.msra.mxu0 0
        %1257 = vmatprep.subr.bf16.mxu0 0
        %1258 = vmatpush1.bf16.msra.mxu0 0
        %1259 = vmatprep.subr.bf16.mxu0 0
        %1260 = vmatpush1.bf16.msra.mxu0 0
        %1261 = vmatprep.subr.bf16.mxu0 0
        %1262 = vmatpush1.bf16.msra.mxu0 0
        %1263 = vmatprep.subr.bf16.mxu0 0
        %1264 = vmatpush1.bf16.msra.mxu0 0
        %1265 = vmatprep.subr.bf16.mxu0 0
        %1266 = vmatpush1.bf16.msra.mxu0 0
        %1267 = vmatprep.mubr.bf16.mxu0 0
        %1268 = vmatmul.mubr.bf16.gmra.mrb[0].mxu0 %v367
        %v1269 = vpop.f32.mrb[0].mxu0
        %v1270 = vadd.f32 %v1209, %v1269
        %v1271 = vpop.f32.mrb[0].mxu0
        %v1272 = vpop.f32.mrb[0].mxu0
        %v1273 = vadd.f32 %v1209, %v1272
        %v1274 = vpop.f32.mrb[0].mxu0
        %1275 = vmatprep.mubr.bf16.mxu0 0
        %1276 = vmatmul.mubr.bf16.gmra.mrb[0].mxu0 %v370
        %v1277 = vpop.f32.mrb[0].mxu0
        %v1278 = vadd.f32 %v1209, %v1277
        %v1279 = vpop.f32.mrb[0].mxu0
        %v1280 = vpop.f32.mrb[0].mxu0
        %v1281 = vadd.f32 %v1209, %v1280
        %v1282 = vpop.f32.mrb[0].mxu0
        %1283 = vmatprep.mubr.bf16.mxu0 0
        %1284 = vmatmul.mubr.bf16.gmra.mrb[0].mxu0 %v373
        %v1285 = vpop.f32.mrb[0].mxu0
        %v1286 = vadd.f32 %v1209, %v1285
        %v1287 = vpop.f32.mrb[0].mxu0
        %v1288 = vpop.f32.mrb[0].mxu0
        %v1289 = vadd.f32 %v1209, %v1288
        %v1290 = vpop.f32.mrb[0].mxu0
        %1291 = vmatprep.mubr.bf16.mxu0 0
        %1292 = vmatmul.mubr.bf16.gmra.mrb[0].mxu0 %v376
        %v1293 = vpop.f32.mrb[0].mxu0
        %v1294 = vadd.f32 %v1209, %v1293
        %v1295 = vpop.f32.mrb[0].mxu0
        %v1296 = vpop.f32.mrb[0].mxu0
        %v1297 = vadd.f32 %v1209, %v1296
        %v1298 = vpop.f32.mrb[0].mxu0
        %1299 = vmatprep.mubr.bf16.mxu0 0
        %1300 = vmatmul.mubr.bf16.gmra.mrb[0].mxu0 %v379
        %v1301 = vpop.f32.mrb[0].mxu0
        %v1302 = vadd.f32 %v1209, %v1301
        %v1303 = vpop.f32.mrb[0].mxu0
        %v1304 = vpop.f32.mrb[0].mxu0
        %v1305 = vadd.f32 %v1209, %v1304
        %v1306 = vpop.f32.mrb[0].mxu0
        %1307 = vmatprep.mubr.bf16.mxu0 0
        %1308 = vmatmul.mubr.bf16.gmra.mrb[0].mxu0 %v382
        %v1309 = vpop.f32.mrb[0].mxu0
        %v1310 = vadd.f32 %v1209, %v1309
        %v1311 = vpop.f32.mrb[0].mxu0
        %v1312 = vpop.f32.mrb[0].mxu0
        %v1313 = vadd.f32 %v1209, %v1312
        %v1314 = vpop.f32.mrb[0].mxu0
        %1315 = vmatprep.mubr.bf16.mxu0 0
        %1316 = vmatmul.mubr.bf16.gmra.mrb[0].mxu0 %v385
        %v1317 = vpop.f32.mrb[0].mxu0
        %v1318 = vadd.f32 %v1209, %v1317
        %v1319 = vpop.f32.mrb[0].mxu0
        %v1320 = vpop.f32.mrb[0].mxu0
        %v1321 = vadd.f32 %v1209, %v1320
        %v1322 = vpop.f32.mrb[0].mxu0
        %1323 = vmatprep.mubr.bf16.mxu0 0
        %1324 = vmatmul.mubr.bf16.gmra.mrb[0].mxu0 %v388
        %v1325 = vpop.f32.mrb[0].mxu0
        %v1326 = vadd.f32 %v1209, %v1325
        %v1327 = vpop.f32.mrb[0].mxu0
        %v1328 = vpop.f32.mrb[0].mxu0
        %v1329 = vadd.f32 %v1209, %v1328
        %v1330 = vpop.f32.mrb[0].mxu0
        %1331 = vdwg.mxu0
        %s1332 = scalar_lea.vmem %s1, 96
        %v1333 = vld [vmem:[%s1332] sm:$0xf]
        %v1334 = vld [vmem:[%s1332 + $0x4] sm:$0xf]
        %v1335 = vld [vmem:[%s1332 + $0x8] sm:$0xf]
        %v1336 = vld [vmem:[%s1332 + $0xc] sm:$0xf]
        %v1337 = vld [vmem:[%s1332 + $0x10] sm:$0xf]
        %v1338 = vld [vmem:[%s1332 + $0x14] sm:$0xf]
        %v1339 = vld [vmem:[%s1332 + $0x18] sm:$0xf]
        %v1340 = vld [vmem:[%s1332 + $0x1c] sm:$0xf]
        %s1341 = scalar_lea.vmem %s2, 3
        %v1342 = vld [vmem:[%s1341] sm:$0x1]
        %v1344 = vlaneseq
        %v1345 = vshrl.u32 %v1344, 7
        %v1346 = vsub.s32 0, %v1345
        %v1347 = vrot.slane %v1342, %v1346
        %v1357 = vunpack.c.l.b16 %v1333
        %v1358 = vunpack.c.l.b16 %v1334
        %v1359 = vunpack.c.l.b16 %v1335
        %v1360 = vunpack.c.l.b16 %v1336
        %v1361 = vunpack.c.l.b16 %v1337
        %v1362 = vunpack.c.l.b16 %v1338
        %v1363 = vunpack.c.l.b16 %v1339
        %v1364 = vunpack.c.l.b16 %v1340
        %v1365 = vpack.c.b16 %v1358, %v1357
        %v1366 = vpack.c.b16 %v1360, %v1359
        %v1367 = vpack.c.b16 %v1362, %v1361
        %v1368 = vpack.c.b16 %v1364, %v1363
        %1373 = vmatprep.subr.bf16.mxu0 0
        %1374 = vmatpush1.bf16.msra.mxu0 %v1365
        %1375 = vmatprep.subr.bf16.mxu0 0
        %1376 = vmatpush1.bf16.msra.mxu0 %v1366
        %1377 = vmatprep.subr.bf16.mxu0 0
        %1378 = vmatpush1.bf16.msra.mxu0 %v1367
        %1379 = vmatprep.subr.bf16.mxu0 0
        %1380 = vmatpush1.bf16.msra.mxu0 %v1368
        %1381 = vmatprep.subr.bf16.mxu0 0
        %1382 = vmatpush1.bf16.msra.mxu0 0
        %1383 = vmatprep.subr.bf16.mxu0 0
        %1384 = vmatpush1.bf16.msra.mxu0 0
        %1385 = vmatprep.subr.bf16.mxu0 0
        %1386 = vmatpush1.bf16.msra.mxu0 0
        %1387 = vmatprep.subr.bf16.mxu0 0
        %1388 = vmatpush1.bf16.msra.mxu0 0
        %1389 = vmatprep.subr.bf16.mxu0 0
        %1390 = vmatpush1.bf16.msra.mxu0 0
        %1391 = vmatprep.subr.bf16.mxu0 0
        %1392 = vmatpush1.bf16.msra.mxu0 0
        %1393 = vmatprep.subr.bf16.mxu0 0
        %1394 = vmatpush1.bf16.msra.mxu0 0
        %1395 = vmatprep.subr.bf16.mxu0 0
        %1396 = vmatpush1.bf16.msra.mxu0 0
        %1397 = vmatprep.subr.bf16.mxu0 0
        %1398 = vmatpush1.bf16.msra.mxu0 0
        %1399 = vmatprep.subr.bf16.mxu0 0
        %1400 = vmatpush1.bf16.msra.mxu0 0
        %1401 = vmatprep.subr.bf16.mxu0 0
        %1402 = vmatpush1.bf16.msra.mxu0 0
        %1403 = vmatprep.subr.bf16.mxu0 0
        %1404 = vmatpush1.bf16.msra.mxu0 0
        %1405 = vmatprep.mubr.bf16.mxu0 0
        %1406 = vmatmul.mubr.bf16.gmra.mrb[0].mxu0 %v367
        %v1407 = vpop.f32.mrb[0].mxu0
        %v1408 = vadd.f32 %v1347, %v1407
        %v1409 = vpop.f32.mrb[0].mxu0
        %v1410 = vpop.f32.mrb[0].mxu0
        %v1411 = vadd.f32 %v1347, %v1410
        %v1412 = vpop.f32.mrb[0].mxu0
        %1413 = vmatprep.mubr.bf16.mxu0 0
        %1414 = vmatmul.mubr.bf16.gmra.mrb[0].mxu0 %v370
        %v1415 = vpop.f32.mrb[0].mxu0
        %v1416 = vadd.f32 %v1347, %v1415
        %v1417 = vpop.f32.mrb[0].mxu0
        %v1418 = vpop.f32.mrb[0].mxu0
        %v1419 = vadd.f32 %v1347, %v1418
        %v1420 = vpop.f32.mrb[0].mxu0
        %1421 = vmatprep.mubr.bf16.mxu0 0
        %1422 = vmatmul.mubr.bf16.gmra.mrb[0].mxu0 %v373
        %v1423 = vpop.f32.mrb[0].mxu0
        %v1424 = vadd.f32 %v1347, %v1423
        %v1425 = vpop.f32.mrb[0].mxu0
        %v1426 = vpop.f32.mrb[0].mxu0
        %v1427 = vadd.f32 %v1347, %v1426
        %v1428 = vpop.f32.mrb[0].mxu0
        %1429 = vmatprep.mubr.bf16.mxu0 0
        %1430 = vmatmul.mubr.bf16.gmra.mrb[0].mxu0 %v376
        %v1431 = vpop.f32.mrb[0].mxu0
        %v1432 = vadd.f32 %v1347, %v1431
        %v1433 = vpop.f32.mrb[0].mxu0
        %v1434 = vpop.f32.mrb[0].mxu0
        %v1435 = vadd.f32 %v1347, %v1434
        %v1436 = vpop.f32.mrb[0].mxu0
        %1437 = vmatprep.mubr.bf16.mxu0 0
        %1438 = vmatmul.mubr.bf16.gmra.mrb[0].mxu0 %v379
        %v1439 = vpop.f32.mrb[0].mxu0
        %v1440 = vadd.f32 %v1347, %v1439
        %v1441 = vpop.f32.mrb[0].mxu0
        %v1442 = vpop.f32.mrb[0].mxu0
        %v1443 = vadd.f32 %v1347, %v1442
        %v1444 = vpop.f32.mrb[0].mxu0
        %1445 = vmatprep.mubr.bf16.mxu0 0
        %1446 = vmatmul.mubr.bf16.gmra.mrb[0].mxu0 %v382
        %v1447 = vpop.f32.mrb[0].mxu0
        %v1448 = vadd.f32 %v1347, %v1447
        %v1449 = vpop.f32.mrb[0].mxu0
        %v1450 = vpop.f32.mrb[0].mxu0
        %v1451 = vadd.f32 %v1347, %v1450
        %v1452 = vpop.f32.mrb[0].mxu0
        %1453 = vmatprep.mubr.bf16.mxu0 0
        %1454 = vmatmul.mubr.bf16.gmra.mrb[0].mxu0 %v385
        %v1455 = vpop.f32.mrb[0].mxu0
        %v1456 = vadd.f32 %v1347, %v1455
        %v1457 = vpop.f32.mrb[0].mxu0
        %v1458 = vpop.f32.mrb[0].mxu0
        %v1459 = vadd.f32 %v1347, %v1458
        %v1460 = vpop.f32.mrb[0].mxu0
        %1461 = vmatprep.mubr.bf16.mxu0 0
        %1462 = vmatmul.mubr.bf16.gmra.mrb[0].mxu0 %v388
        %v1463 = vpop.f32.mrb[0].mxu0
        %v1464 = vadd.f32 %v1347, %v1463
        %v1465 = vpop.f32.mrb[0].mxu0
        %v1466 = vpop.f32.mrb[0].mxu0
        %v1467 = vadd.f32 %v1347, %v1466
        %v1468 = vpop.f32.mrb[0].mxu0
        %1469 = vdwg.mxu0
        %s1470 = scalar_lea.vmem %s1, 160
        %v1471 = vld [vmem:[%s1470] sm:$0xf]
        %v1472 = vld [vmem:[%s1470 + $0x4] sm:$0xf]
        %v1473 = vld [vmem:[%s1470 + $0x8] sm:$0xf]
        %v1474 = vld [vmem:[%s1470 + $0xc] sm:$0xf]
        %v1475 = vld [vmem:[%s1470 + $0x10] sm:$0xf]
        %v1476 = vld [vmem:[%s1470 + $0x14] sm:$0xf]
        %v1477 = vld [vmem:[%s1470 + $0x18] sm:$0xf]
        %v1478 = vld [vmem:[%s1470 + $0x1c] sm:$0xf]
        %s1479 = scalar_lea.vmem %s2, 5
        %v1480 = vld [vmem:[%s1479] sm:$0x1]
        %v1482 = vlaneseq
        %v1483 = vshrl.u32 %v1482, 7
        %v1484 = vsub.s32 0, %v1483
        %v1485 = vrot.slane %v1480, %v1484
        %v1495 = vunpack.c.l.b16 %v1471
        %v1496 = vunpack.c.l.b16 %v1472
        %v1497 = vunpack.c.l.b16 %v1473
        %v1498 = vunpack.c.l.b16 %v1474
        %v1499 = vunpack.c.l.b16 %v1475
        %v1500 = vunpack.c.l.b16 %v1476
        %v1501 = vunpack.c.l.b16 %v1477
        %v1502 = vunpack.c.l.b16 %v1478
        %v1503 = vpack.c.b16 %v1496, %v1495
        %v1504 = vpack.c.b16 %v1498, %v1497
        %v1505 = vpack.c.b16 %v1500, %v1499
        %v1506 = vpack.c.b16 %v1502, %v1501
        %1511 = vmatprep.subr.bf16.mxu0 0
        %1512 = vmatpush1.bf16.msra.mxu0 %v1503
        %1513 = vmatprep.subr.bf16.mxu0 0
        %1514 = vmatpush1.bf16.msra.mxu0 %v1504
        %1515 = vmatprep.subr.bf16.mxu0 0
        %1516 = vmatpush1.bf16.msra.mxu0 %v1505
        %1517 = vmatprep.subr.bf16.mxu0 0
        %1518 = vmatpush1.bf16.msra.mxu0 %v1506
        %1519 = vmatprep.subr.bf16.mxu0 0
        %1520 = vmatpush1.bf16.msra.mxu0 0
        %1521 = vmatprep.subr.bf16.mxu0 0
        %1522 = vmatpush1.bf16.msra.mxu0 0
        %1523 = vmatprep.subr.bf16.mxu0 0
        %1524 = vmatpush1.bf16.msra.mxu0 0
        %1525 = vmatprep.subr.bf16.mxu0 0
        %1526 = vmatpush1.bf16.msra.mxu0 0
        %1527 = vmatprep.subr.bf16.mxu0 0
        %1528 = vmatpush1.bf16.msra.mxu0 0
        %1529 = vmatprep.subr.bf16.mxu0 0
        %1530 = vmatpush1.bf16.msra.mxu0 0
        %1531 = vmatprep.subr.bf16.mxu0 0
        %1532 = vmatpush1.bf16.msra.mxu0 0
        %1533 = vmatprep.subr.bf16.mxu0 0
        %1534 = vmatpush1.bf16.msra.mxu0 0
        %1535 = vmatprep.subr.bf16.mxu0 0
        %1536 = vmatpush1.bf16.msra.mxu0 0
        %1537 = vmatprep.subr.bf16.mxu0 0
        %1538 = vmatpush1.bf16.msra.mxu0 0
        %1539 = vmatprep.subr.bf16.mxu0 0
        %1540 = vmatpush1.bf16.msra.mxu0 0
        %1541 = vmatprep.subr.bf16.mxu0 0
        %1542 = vmatpush1.bf16.msra.mxu0 0
        %1543 = vmatprep.mubr.bf16.mxu0 0
        %1544 = vmatmul.mubr.bf16.gmra.mrb[0].mxu0 %v367
        %v1545 = vpop.f32.mrb[0].mxu0
        %v1546 = vadd.f32 %v1485, %v1545
        %v1547 = vpop.f32.mrb[0].mxu0
        %v1548 = vpop.f32.mrb[0].mxu0
        %v1549 = vadd.f32 %v1485, %v1548
        %v1550 = vpop.f32.mrb[0].mxu0
        %1551 = vmatprep.mubr.bf16.mxu0 0
        %1552 = vmatmul.mubr.bf16.gmra.mrb[0].mxu0 %v370
        %v1553 = vpop.f32.mrb[0].mxu0
        %v1554 = vadd.f32 %v1485, %v1553
        %v1555 = vpop.f32.mrb[0].mxu0
        %v1556 = vpop.f32.mrb[0].mxu0
        %v1557 = vadd.f32 %v1485, %v1556
        %v1558 = vpop.f32.mrb[0].mxu0
        %1559 = vmatprep.mubr.bf16.mxu0 0
        %1560 = vmatmul.mubr.bf16.gmra.mrb[0].mxu0 %v373
        %v1561 = vpop.f32.mrb[0].mxu0
        %v1562 = vadd.f32 %v1485, %v1561
        %v1563 = vpop.f32.mrb[0].mxu0
        %v1564 = vpop.f32.mrb[0].mxu0
        %v1565 = vadd.f32 %v1485, %v1564
        %v1566 = vpop.f32.mrb[0].mxu0
        %1567 = vmatprep.mubr.bf16.mxu0 0
        %1568 = vmatmul.mubr.bf16.gmra.mrb[0].mxu0 %v376
        %v1569 = vpop.f32.mrb[0].mxu0
        %v1570 = vadd.f32 %v1485, %v1569
        %v1571 = vpop.f32.mrb[0].mxu0
        %v1572 = vpop.f32.mrb[0].mxu0
        %v1573 = vadd.f32 %v1485, %v1572
        %v1574 = vpop.f32.mrb[0].mxu0
        %1575 = vmatprep.mubr.bf16.mxu0 0
        %1576 = vmatmul.mubr.bf16.gmra.mrb[0].mxu0 %v379
        %v1577 = vpop.f32.mrb[0].mxu0
        %v1578 = vadd.f32 %v1485, %v1577
        %v1579 = vpop.f32.mrb[0].mxu0
        %v1580 = vpop.f32.mrb[0].mxu0
        %v1581 = vadd.f32 %v1485, %v1580
        %v1582 = vpop.f32.mrb[0].mxu0
        %1583 = vmatprep.mubr.bf16.mxu0 0
        %1584 = vmatmul.mubr.bf16.gmra.mrb[0].mxu0 %v382
        %v1585 = vpop.f32.mrb[0].mxu0
        %v1586 = vadd.f32 %v1485, %v1585
        %v1587 = vpop.f32.mrb[0].mxu0
        %v1588 = vpop.f32.mrb[0].mxu0
        %v1589 = vadd.f32 %v1485, %v1588
        %v1590 = vpop.f32.mrb[0].mxu0
        %1591 = vmatprep.mubr.bf16.mxu0 0
        %1592 = vmatmul.mubr.bf16.gmra.mrb[0].mxu0 %v385
        %v1593 = vpop.f32.mrb[0].mxu0
        %v1594 = vadd.f32 %v1485, %v1593
        %v1595 = vpop.f32.mrb[0].mxu0
        %v1596 = vpop.f32.mrb[0].mxu0
        %v1597 = vadd.f32 %v1485, %v1596
        %v1598 = vpop.f32.mrb[0].mxu0
        %1599 = vmatprep.mubr.bf16.mxu0 0
        %1600 = vmatmul.mubr.bf16.gmra.mrb[0].mxu0 %v388
        %v1601 = vpop.f32.mrb[0].mxu0
        %v1602 = vadd.f32 %v1485, %v1601
        %v1603 = vpop.f32.mrb[0].mxu0
        %v1604 = vpop.f32.mrb[0].mxu0
        %v1605 = vadd.f32 %v1485, %v1604
        %v1606 = vpop.f32.mrb[0].mxu0
        %1607 = vdwg.mxu0
        %v1608 = vpack.c.bf16 %v1273, %v1270
        %v1609 = vpack.c.bf16 %v1281, %v1278
        %v1610 = vpack.c.bf16 %v1289, %v1286
        %v1611 = vpack.c.bf16 %v1297, %v1294
        %v1612 = vpack.c.bf16 %v1305, %v1302
        %v1613 = vpack.c.bf16 %v1313, %v1310
        %v1614 = vpack.c.bf16 %v1321, %v1318
        %v1615 = vpack.c.bf16 %v1329, %v1326
        %v1616 = vpack.c.bf16 %v1411, %v1408
        %v1617 = vpack.c.bf16 %v1419, %v1416
        %v1618 = vpack.c.bf16 %v1427, %v1424
        %v1619 = vpack.c.bf16 %v1435, %v1432
        %v1620 = vpack.c.bf16 %v1443, %v1440
        %v1621 = vpack.c.bf16 %v1451, %v1448
        %v1622 = vpack.c.bf16 %v1459, %v1456
        %v1623 = vpack.c.bf16 %v1467, %v1464
        %v1625 = vsel %vm779, %v1608, 0
        %v1628 = vsel %vm779, %v1609, 0
        %v1631 = vsel %vm779, %v1610, 0
        %v1634 = vsel %vm779, %v1611, 0
        %v1637 = vsel %vm779, %v1612, 0
        %v1640 = vsel %vm779, %v1613, 0
        %v1643 = vsel %vm779, %v1614, 0
        %v1646 = vsel %vm779, %v1615, 0
        %v1649 = vsel %vm779, %v1616, 0
        %v1652 = vsel %vm779, %v1617, 0
        %v1655 = vsel %vm779, %v1618, 0
        %v1658 = vsel %vm779, %v1619, 0
        %v1661 = vsel %vm779, %v1620, 0
        %v1664 = vsel %vm779, %v1621, 0
        %v1667 = vsel %vm779, %v1622, 0
        %v1670 = vsel %vm779, %v1623, 0
        %1672 = vmatprep.subr.bf16.mxu0 0
        %1673 = vmatpush1.bf16.xpose.msra.mxu0 %v1649
        %1674 = vmatprep.subr.bf16.mxu0 0
        %1675 = vmatpush1.bf16.xpose.msra.mxu0 %v1652
        %1676 = vmatprep.subr.bf16.mxu0 0
        %1677 = vmatpush1.bf16.xpose.msra.mxu0 %v1655
        %1678 = vmatprep.subr.bf16.mxu0 0
        %1679 = vmatpush1.bf16.xpose.msra.mxu0 %v1658
        %1680 = vmatprep.subr.bf16.mxu0 0
        %1681 = vmatpush1.bf16.xpose.msra.mxu0 %v1661
        %1682 = vmatprep.subr.bf16.mxu0 0
        %1683 = vmatpush1.bf16.xpose.msra.mxu0 %v1664
        %1684 = vmatprep.subr.bf16.mxu0 0
        %1685 = vmatpush1.bf16.xpose.msra.mxu0 %v1667
        %1686 = vmatprep.subr.bf16.mxu0 0
        %1687 = vmatpush1.bf16.xpose.msra.mxu0 %v1670
        %1688 = vmatprep.subr.bf16.mxu0 0
        %1689 = vmatpush1.bf16.xpose.msra.mxu0 0
        %1690 = vmatprep.subr.bf16.mxu0 0
        %1691 = vmatpush1.bf16.xpose.msra.mxu0 0
        %1692 = vmatprep.subr.bf16.mxu0 0
        %1693 = vmatpush1.bf16.xpose.msra.mxu0 0
        %1694 = vmatprep.subr.bf16.mxu0 0
        %1695 = vmatpush1.bf16.xpose.msra.mxu0 0
        %1696 = vmatprep.subr.bf16.mxu0 0
        %1697 = vmatpush1.bf16.xpose.msra.mxu0 0
        %1698 = vmatprep.subr.bf16.mxu0 0
        %1699 = vmatpush1.bf16.xpose.msra.mxu0 0
        %1700 = vmatprep.subr.bf16.mxu0 0
        %1701 = vmatpush1.bf16.xpose.msra.mxu0 0
        %1702 = vmatprep.subr.bf16.mxu0 0
        %1703 = vmatpush1.bf16.xpose.msra.mxu0 0
        %1704 = vmatprep.mubr.bf16.mxu0 0
        %1705 = vmatmul.mubr.bf16.gmra.mrb[0].mxu0 %v1625
        %v1706 = vpop.f32.mrb[0].mxu0
        %v1707 = vadd.f32 %v270, %v1706
        %v1708 = vpop.f32.mrb[0].mxu0
        %v1709 = vpop.f32.mrb[0].mxu0
        %v1710 = vadd.f32 %v271, %v1709
        %v1711 = vpop.f32.mrb[0].mxu0
        %1712 = vmatprep.mubr.bf16.mxu0 0
        %1713 = vmatmul.mubr.bf16.gmra.mrb[0].mxu0 %v1628
        %v1714 = vpop.f32.mrb[0].mxu0
        %v1715 = vadd.f32 %v272, %v1714
        %v1716 = vpop.f32.mrb[0].mxu0
        %v1717 = vpop.f32.mrb[0].mxu0
        %v1718 = vadd.f32 %v273, %v1717
        %v1719 = vpop.f32.mrb[0].mxu0
        %1720 = vmatprep.mubr.bf16.mxu0 0
        %1721 = vmatmul.mubr.bf16.gmra.mrb[0].mxu0 %v1631
        %v1722 = vpop.f32.mrb[0].mxu0
        %v1723 = vadd.f32 %v274, %v1722
        %v1724 = vpop.f32.mrb[0].mxu0
        %v1725 = vpop.f32.mrb[0].mxu0
        %v1726 = vadd.f32 %v275, %v1725
        %v1727 = vpop.f32.mrb[0].mxu0
        %1728 = vmatprep.mubr.bf16.mxu0 0
        %1729 = vmatmul.mubr.bf16.gmra.mrb[0].mxu0 %v1634
        %v1730 = vpop.f32.mrb[0].mxu0
        %v1731 = vadd.f32 %v276, %v1730
        %v1732 = vpop.f32.mrb[0].mxu0
        %v1733 = vpop.f32.mrb[0].mxu0
        %v1734 = vadd.f32 %v277, %v1733
        %v1735 = vpop.f32.mrb[0].mxu0
        %1736 = vmatprep.mubr.bf16.mxu0 0
        %1737 = vmatmul.mubr.bf16.gmra.mrb[0].mxu0 %v1637
        %v1738 = vpop.f32.mrb[0].mxu0
        %v1739 = vadd.f32 %v278, %v1738
        %v1740 = vpop.f32.mrb[0].mxu0
        %v1741 = vpop.f32.mrb[0].mxu0
        %v1742 = vadd.f32 %v279, %v1741
        %v1743 = vpop.f32.mrb[0].mxu0
        %1744 = vmatprep.mubr.bf16.mxu0 0
        %1745 = vmatmul.mubr.bf16.gmra.mrb[0].mxu0 %v1640
        %v1746 = vpop.f32.mrb[0].mxu0
        %v1747 = vadd.f32 %v280, %v1746
        %v1748 = vpop.f32.mrb[0].mxu0
        %v1749 = vpop.f32.mrb[0].mxu0
        %v1750 = vadd.f32 %v281, %v1749
        %v1751 = vpop.f32.mrb[0].mxu0
        %1752 = vmatprep.mubr.bf16.mxu0 0
        %1753 = vmatmul.mubr.bf16.gmra.mrb[0].mxu0 %v1643
        %v1754 = vpop.f32.mrb[0].mxu0
        %v1755 = vadd.f32 %v282, %v1754
        %v1756 = vpop.f32.mrb[0].mxu0
        %v1757 = vpop.f32.mrb[0].mxu0
        %v1758 = vadd.f32 %v283, %v1757
        %v1759 = vpop.f32.mrb[0].mxu0
        %1760 = vmatprep.mubr.bf16.mxu0 0
        %1761 = vmatmul.mubr.bf16.gmra.mrb[0].mxu0 %v1646
        %v1762 = vpop.f32.mrb[0].mxu0
        %v1763 = vadd.f32 %v284, %v1762
        %v1764 = vpop.f32.mrb[0].mxu0
        %v1765 = vpop.f32.mrb[0].mxu0
        %v1766 = vadd.f32 %v285, %v1765
        %v1767 = vpop.f32.mrb[0].mxu0
        %1768 = vdwg.mxu0
        %1769 = vmax.xlane.f32.xlu0 %v1707
        %v1770 = vpop.xlane.xlu0 %1769
        %1771 = vmax.xlane.f32.xlu0 %v1710
        %v1772 = vpop.xlane.xlu0 %1771
        %1773 = vmax.xlane.f32.xlu0 %v1715
        %v1774 = vpop.xlane.xlu0 %1773
        %1775 = vmax.xlane.f32.xlu0 %v1718
        %v1776 = vpop.xlane.xlu0 %1775
        %1777 = vmax.xlane.f32.xlu0 %v1723
        %v1778 = vpop.xlane.xlu0 %1777
        %1779 = vmax.xlane.f32.xlu0 %v1726
        %v1780 = vpop.xlane.xlu0 %1779
        %1781 = vmax.xlane.f32.xlu0 %v1731
        %v1782 = vpop.xlane.xlu0 %1781
        %1783 = vmax.xlane.f32.xlu0 %v1734
        %v1784 = vpop.xlane.xlu0 %1783
        %1785 = vmax.xlane.f32.xlu0 %v1739
        %v1786 = vpop.xlane.xlu0 %1785
        %1787 = vmax.xlane.f32.xlu0 %v1742
        %v1788 = vpop.xlane.xlu0 %1787
        %1789 = vmax.xlane.f32.xlu0 %v1747
        %v1790 = vpop.xlane.xlu0 %1789
        %1791 = vmax.xlane.f32.xlu0 %v1750
        %v1792 = vpop.xlane.xlu0 %1791
        %1793 = vmax.xlane.f32.xlu0 %v1755
        %v1794 = vpop.xlane.xlu0 %1793
        %1795 = vmax.xlane.f32.xlu0 %v1758
        %v1796 = vpop.xlane.xlu0 %1795
        %1797 = vmax.xlane.f32.xlu0 %v1763
        %v1798 = vpop.xlane.xlu0 %1797
        %1799 = vmax.xlane.f32.xlu0 %v1766
        %v1800 = vpop.xlane.xlu0 %1799
        %v1801 = vsub.f32 %v1707, %v1770
        %v1802 = vsub.f32 %v1710, %v1772
        %v1803 = vsub.f32 %v1715, %v1774
        %v1804 = vsub.f32 %v1718, %v1776
        %v1805 = vsub.f32 %v1723, %v1778
        %v1806 = vsub.f32 %v1726, %v1780
        %v1807 = vsub.f32 %v1731, %v1782
        %v1808 = vsub.f32 %v1734, %v1784
        %v1809 = vsub.f32 %v1739, %v1786
        %v1810 = vsub.f32 %v1742, %v1788
        %v1811 = vsub.f32 %v1747, %v1790
        %v1812 = vsub.f32 %v1750, %v1792
        %v1813 = vsub.f32 %v1755, %v1794
        %v1814 = vsub.f32 %v1758, %v1796
        %v1815 = vsub.f32 %v1763, %v1798
        %v1816 = vsub.f32 %v1766, %v1800
        %v1817 = vmul.f32 %v1801, 1.442695
        %v1818 = vpow.pop %v1817
        %v1819 = vmul.f32 %v1802, 1.442695
        %v1820 = vpow.pop %v1819
        %v1821 = vmul.f32 %v1803, 1.442695
        %v1822 = vpow.pop %v1821
        %v1823 = vmul.f32 %v1804, 1.442695
        %v1824 = vpow.pop %v1823
        %v1825 = vmul.f32 %v1805, 1.442695
        %v1826 = vpow.pop %v1825
        %v1827 = vmul.f32 %v1806, 1.442695
        %v1828 = vpow.pop %v1827
        %v1829 = vmul.f32 %v1807, 1.442695
        %v1830 = vpow.pop %v1829
        %v1831 = vmul.f32 %v1808, 1.442695
        %v1832 = vpow.pop %v1831
        %v1833 = vmul.f32 %v1809, 1.442695
        %v1834 = vpow.pop %v1833
        %v1835 = vmul.f32 %v1810, 1.442695
        %v1836 = vpow.pop %v1835
        %v1837 = vmul.f32 %v1811, 1.442695
        %v1838 = vpow.pop %v1837
        %v1839 = vmul.f32 %v1812, 1.442695
        %v1840 = vpow.pop %v1839
        %v1841 = vmul.f32 %v1813, 1.442695
        %v1842 = vpow.pop %v1841
        %v1843 = vmul.f32 %v1814, 1.442695
        %v1844 = vpow.pop %v1843
        %v1845 = vmul.f32 %v1815, 1.442695
        %v1846 = vpow.pop %v1845
        %v1847 = vmul.f32 %v1816, 1.442695
        %v1848 = vpow.pop %v1847
        %1849 = vadd.xlane.f32.xlu0 %v1818
        %v1850 = vpop.xlane.xlu0 %1849
        %1851 = vadd.xlane.f32.xlu0 %v1820
        %v1852 = vpop.xlane.xlu0 %1851
        %1853 = vadd.xlane.f32.xlu0 %v1822
        %v1854 = vpop.xlane.xlu0 %1853
        %1855 = vadd.xlane.f32.xlu0 %v1824
        %v1856 = vpop.xlane.xlu0 %1855
        %1857 = vadd.xlane.f32.xlu0 %v1826
        %v1858 = vpop.xlane.xlu0 %1857
        %1859 = vadd.xlane.f32.xlu0 %v1828
        %v1860 = vpop.xlane.xlu0 %1859
        %1861 = vadd.xlane.f32.xlu0 %v1830
        %v1862 = vpop.xlane.xlu0 %1861
        %1863 = vadd.xlane.f32.xlu0 %v1832
        %v1864 = vpop.xlane.xlu0 %1863
        %1865 = vadd.xlane.f32.xlu0 %v1834
        %v1866 = vpop.xlane.xlu0 %1865
        %1867 = vadd.xlane.f32.xlu0 %v1836
        %v1868 = vpop.xlane.xlu0 %1867
        %1869 = vadd.xlane.f32.xlu0 %v1838
        %v1870 = vpop.xlane.xlu0 %1869
        %1871 = vadd.xlane.f32.xlu0 %v1840
        %v1872 = vpop.xlane.xlu0 %1871
        %1873 = vadd.xlane.f32.xlu0 %v1842
        %v1874 = vpop.xlane.xlu0 %1873
        %1875 = vadd.xlane.f32.xlu0 %v1844
        %v1876 = vpop.xlane.xlu0 %1875
        %1877 = vadd.xlane.f32.xlu0 %v1846
        %v1878 = vpop.xlane.xlu0 %1877
        %1879 = vadd.xlane.f32.xlu0 %v1848
        %v1880 = vpop.xlane.xlu0 %1879
        %v1881 = vrcp.pop %v1850
        %v1882 = vrcp.pop %v1852
        %v1883 = vrcp.pop %v1854
        %v1884 = vrcp.pop %v1856
        %v1885 = vrcp.pop %v1858
        %v1886 = vrcp.pop %v1860
        %v1887 = vrcp.pop %v1862
        %v1888 = vrcp.pop %v1864
        %v1889 = vrcp.pop %v1866
        %v1890 = vrcp.pop %v1868
        %v1891 = vrcp.pop %v1870
        %v1892 = vrcp.pop %v1872
        %v1893 = vrcp.pop %v1874
        %v1894 = vrcp.pop %v1876
        %v1895 = vrcp.pop %v1878
        %v1896 = vrcp.pop %v1880
        %v1897 = vmul.f32 %v1818, %v1881
        %v1898 = vmul.f32 %v1820, %v1882
        %v1899 = vmul.f32 %v1822, %v1883
        %v1900 = vmul.f32 %v1824, %v1884
        %v1901 = vmul.f32 %v1826, %v1885
        %v1902 = vmul.f32 %v1828, %v1886
        %v1903 = vmul.f32 %v1830, %v1887
        %v1904 = vmul.f32 %v1832, %v1888
        %v1905 = vmul.f32 %v1834, %v1889
        %v1906 = vmul.f32 %v1836, %v1890
        %v1907 = vmul.f32 %v1838, %v1891
        %v1908 = vmul.f32 %v1840, %v1892
        %v1909 = vmul.f32 %v1842, %v1893
        %v1910 = vmul.f32 %v1844, %v1894
        %v1911 = vmul.f32 %v1846, %v1895
        %v1912 = vmul.f32 %v1848, %v1896
        %v1913 = vpack.c.bf16 %v1898, %v1897
        %v1914 = vpack.c.bf16 %v1900, %v1899
        %v1915 = vpack.c.bf16 %v1902, %v1901
        %v1916 = vpack.c.bf16 %v1904, %v1903
        %v1917 = vpack.c.bf16 %v1906, %v1905
        %v1918 = vpack.c.bf16 %v1908, %v1907
        %v1919 = vpack.c.bf16 %v1910, %v1909
        %v1920 = vpack.c.bf16 %v1912, %v1911
        %v1921 = vpack.c.bf16 %v1549, %v1546
        %v1922 = vpack.c.bf16 %v1557, %v1554
        %v1923 = vpack.c.bf16 %v1565, %v1562
        %v1924 = vpack.c.bf16 %v1573, %v1570
        %v1925 = vpack.c.bf16 %v1581, %v1578
        %v1926 = vpack.c.bf16 %v1589, %v1586
        %v1927 = vpack.c.bf16 %v1597, %v1594
        %v1928 = vpack.c.bf16 %v1605, %v1602
        %1929 = vmatprep.subr.bf16.mxu0 0
        %1930 = vmatpush1.bf16.msra.mxu0 %v1921
        %1931 = vmatprep.subr.bf16.mxu0 0
        %1932 = vmatpush1.bf16.msra.mxu0 %v1922
        %1933 = vmatprep.subr.bf16.mxu0 0
        %1934 = vmatpush1.bf16.msra.mxu0 %v1923
        %1935 = vmatprep.subr.bf16.mxu0 0
        %1936 = vmatpush1.bf16.msra.mxu0 %v1924
        %1937 = vmatprep.subr.bf16.mxu0 0
        %1938 = vmatpush1.bf16.msra.mxu0 %v1925
        %1939 = vmatprep.subr.bf16.mxu0 0
        %1940 = vmatpush1.bf16.msra.mxu0 %v1926
        %1941 = vmatprep.subr.bf16.mxu0 0
        %1942 = vmatpush1.bf16.msra.mxu0 %v1927
        %1943 = vmatprep.subr.bf16.mxu0 0
        %1944 = vmatpush1.bf16.msra.mxu0 %v1928
        %1945 = vmatprep.subr.bf16.mxu0 0
        %1946 = vmatpush1.bf16.msra.mxu0 0
        %1947 = vmatprep.subr.bf16.mxu0 0
        %1948 = vmatpush1.bf16.msra.mxu0 0
        %1949 = vmatprep.subr.bf16.mxu0 0
        %1950 = vmatpush1.bf16.msra.mxu0 0
        %1951 = vmatprep.subr.bf16.mxu0 0
        %1952 = vmatpush1.bf16.msra.mxu0 0
        %1953 = vmatprep.subr.bf16.mxu0 0
        %1954 = vmatpush1.bf16.msra.mxu0 0
        %1955 = vmatprep.subr.bf16.mxu0 0
        %1956 = vmatpush1.bf16.msra.mxu0 0
        %1957 = vmatprep.subr.bf16.mxu0 0
        %1958 = vmatpush1.bf16.msra.mxu0 0
        %1959 = vmatprep.subr.bf16.mxu0 0
        %1960 = vmatpush1.bf16.msra.mxu0 0
        %1961 = vmatprep.mubr.bf16.mxu0 0
        %1962 = vmatmul.mubr.bf16.gmra.mrb[0].mxu0 %v1913
        %v1963 = vpop.f32.mrb[0].mxu0
        %v1964 = vadd.f32 0.0, %v1963
        %v1965 = vpop.f32.mrb[0].mxu0
        %v1966 = vpop.f32.mrb[0].mxu0
        %v1967 = vadd.f32 0.0, %v1966
        %v1968 = vpop.f32.mrb[0].mxu0
        %1969 = vmatprep.mubr.bf16.mxu0 0
        %1970 = vmatmul.mubr.bf16.gmra.mrb[0].mxu0 %v1914
        %v1971 = vpop.f32.mrb[0].mxu0
        %v1972 = vadd.f32 0.0, %v1971
        %v1973 = vpop.f32.mrb[0].mxu0
        %v1974 = vpop.f32.mrb[0].mxu0
        %v1975 = vadd.f32 0.0, %v1974
        %v1976 = vpop.f32.mrb[0].mxu0
        %1977 = vmatprep.mubr.bf16.mxu0 0
        %1978 = vmatmul.mubr.bf16.gmra.mrb[0].mxu0 %v1915
        %v1979 = vpop.f32.mrb[0].mxu0
        %v1980 = vadd.f32 0.0, %v1979
        %v1981 = vpop.f32.mrb[0].mxu0
        %v1982 = vpop.f32.mrb[0].mxu0
        %v1983 = vadd.f32 0.0, %v1982
        %v1984 = vpop.f32.mrb[0].mxu0
        %1985 = vmatprep.mubr.bf16.mxu0 0
        %1986 = vmatmul.mubr.bf16.gmra.mrb[0].mxu0 %v1916
        %v1987 = vpop.f32.mrb[0].mxu0
        %v1988 = vadd.f32 0.0, %v1987
        %v1989 = vpop.f32.mrb[0].mxu0
        %v1990 = vpop.f32.mrb[0].mxu0
        %v1991 = vadd.f32 0.0, %v1990
        %v1992 = vpop.f32.mrb[0].mxu0
        %1993 = vmatprep.mubr.bf16.mxu0 0
        %1994 = vmatmul.mubr.bf16.gmra.mrb[0].mxu0 %v1917
        %v1995 = vpop.f32.mrb[0].mxu0
        %v1996 = vadd.f32 0.0, %v1995
        %v1997 = vpop.f32.mrb[0].mxu0
        %v1998 = vpop.f32.mrb[0].mxu0
        %v1999 = vadd.f32 0.0, %v1998
        %v2000 = vpop.f32.mrb[0].mxu0
        %2001 = vmatprep.mubr.bf16.mxu0 0
        %2002 = vmatmul.mubr.bf16.gmra.mrb[0].mxu0 %v1918
        %v2003 = vpop.f32.mrb[0].mxu0
        %v2004 = vadd.f32 0.0, %v2003
        %v2005 = vpop.f32.mrb[0].mxu0
        %v2006 = vpop.f32.mrb[0].mxu0
        %v2007 = vadd.f32 0.0, %v2006
        %v2008 = vpop.f32.mrb[0].mxu0
        %2009 = vmatprep.mubr.bf16.mxu0 0
        %2010 = vmatmul.mubr.bf16.gmra.mrb[0].mxu0 %v1919
        %v2011 = vpop.f32.mrb[0].mxu0
        %v2012 = vadd.f32 0.0, %v2011
        %v2013 = vpop.f32.mrb[0].mxu0
        %v2014 = vpop.f32.mrb[0].mxu0
        %v2015 = vadd.f32 0.0, %v2014
        %v2016 = vpop.f32.mrb[0].mxu0
        %2017 = vmatprep.mubr.bf16.mxu0 0
        %2018 = vmatmul.mubr.bf16.gmra.mrb[0].mxu0 %v1920
        %v2019 = vpop.f32.mrb[0].mxu0
        %v2020 = vadd.f32 0.0, %v2019
        %v2021 = vpop.f32.mrb[0].mxu0
        %v2022 = vpop.f32.mrb[0].mxu0
        %v2023 = vadd.f32 0.0, %v2022
        %v2024 = vpop.f32.mrb[0].mxu0
        %2025 = vdwg.mxu0
        %v2026 = vpack.c.bf16 %v1967, %v1964
        %v2027 = vpack.c.bf16 %v1975, %v1972
        %v2028 = vpack.c.bf16 %v1983, %v1980
        %v2029 = vpack.c.bf16 %v1991, %v1988
        %v2030 = vpack.c.bf16 %v1999, %v1996
        %v2031 = vpack.c.bf16 %v2007, %v2004
        %v2032 = vpack.c.bf16 %v2015, %v2012
        %v2033 = vpack.c.bf16 %v2023, %v2020
        %s2034 = scalar_lea.vmem %s3, 16
        %v2035 = vld [vmem:[%s2034] sm:$0xf]
        %v2036 = vld [vmem:[%s2034 + $0x4] sm:$0xf]
        %v2037 = vld [vmem:[%s2034 + $0x8] sm:$0xf]
        %v2038 = vld [vmem:[%s2034 + $0xc] sm:$0xf]
        %v2043 = vunpack.c.l.b16 %v2035
        %v2044 = vunpack.c.l.b16 %v2036
        %v2045 = vunpack.c.l.b16 %v2037
        %v2046 = vunpack.c.l.b16 %v2038
        %v2047 = vpack.c.b16 %v2044, %v2043
        %v2048 = vpack.c.b16 %v2046, %v2045
        %v2052 = vsel %vm779, %v2026, 0
        %v2055 = vsel %vm779, %v2027, 0
        %v2058 = vsel %vm779, %v2028, 0
        %v2061 = vsel %vm779, %v2029, 0
        %v2064 = vsel %vm779, %v2030, 0
        %v2067 = vsel %vm779, %v2031, 0
        %v2070 = vsel %vm779, %v2032, 0
        %v2073 = vsel %vm779, %v2033, 0
        %2075 = vmatprep.subr.bf16.mxu0 0
        %2076 = vmatpush1.bf16.msra.mxu0 %v2047
        %2077 = vmatprep.subr.bf16.mxu0 0
        %2078 = vmatpush1.bf16.msra.mxu0 %v2048
        %2079 = vmatprep.subr.bf16.mxu0 0
        %2080 = vmatpush1.bf16.msra.mxu0 0
        %2081 = vmatprep.subr.bf16.mxu0 0
        %2082 = vmatpush1.bf16.msra.mxu0 0
        %2083 = vmatprep.subr.bf16.mxu0 0
        %2084 = vmatpush1.bf16.msra.mxu0 0
        %2085 = vmatprep.subr.bf16.mxu0 0
        %2086 = vmatpush1.bf16.msra.mxu0 0
        %2087 = vmatprep.subr.bf16.mxu0 0
        %2088 = vmatpush1.bf16.msra.mxu0 0
        %2089 = vmatprep.subr.bf16.mxu0 0
        %2090 = vmatpush1.bf16.msra.mxu0 0
        %2091 = vmatprep.subr.bf16.mxu0 0
        %2092 = vmatpush1.bf16.msra.mxu0 0
        %2093 = vmatprep.subr.bf16.mxu0 0
        %2094 = vmatpush1.bf16.msra.mxu0 0
        %2095 = vmatprep.subr.bf16.mxu0 0
        %2096 = vmatpush1.bf16.msra.mxu0 0
        %2097 = vmatprep.subr.bf16.mxu0 0
        %2098 = vmatpush1.bf16.msra.mxu0 0
        %2099 = vmatprep.subr.bf16.mxu0 0
        %2100 = vmatpush1.bf16.msra.mxu0 0
        %2101 = vmatprep.subr.bf16.mxu0 0
        %2102 = vmatpush1.bf16.msra.mxu0 0
        %2103 = vmatprep.subr.bf16.mxu0 0
        %2104 = vmatpush1.bf16.msra.mxu0 0
        %2105 = vmatprep.subr.bf16.mxu0 0
        %2106 = vmatpush1.bf16.msra.mxu0 0
        %2107 = vmatprep.mubr.bf16.mxu0 0
        %2108 = vmatmul.mubr.bf16.gmra.mrb[0].mxu0 %v2052
        %v2109 = vpop.f32.mrb[0].mxu0
        %v2110 = vadd.f32 0.0, %v2109
        %v2111 = vpop.f32.mrb[0].mxu0
        %v2112 = vpop.f32.mrb[0].mxu0
        %v2113 = vadd.f32 0.0, %v2112
        %v2114 = vpop.f32.mrb[0].mxu0
        %2115 = vmatprep.mubr.bf16.mxu0 0
        %2116 = vmatmul.mubr.bf16.gmra.mrb[0].mxu0 %v2055
        %v2117 = vpop.f32.mrb[0].mxu0
        %v2118 = vadd.f32 0.0, %v2117
        %v2119 = vpop.f32.mrb[0].mxu0
        %v2120 = vpop.f32.mrb[0].mxu0
        %v2121 = vadd.f32 0.0, %v2120
        %v2122 = vpop.f32.mrb[0].mxu0
        %2123 = vmatprep.mubr.bf16.mxu0 0
        %2124 = vmatmul.mubr.bf16.gmra.mrb[0].mxu0 %v2058
        %v2125 = vpop.f32.mrb[0].mxu0
        %v2126 = vadd.f32 0.0, %v2125
        %v2127 = vpop.f32.mrb[0].mxu0
        %v2128 = vpop.f32.mrb[0].mxu0
        %v2129 = vadd.f32 0.0, %v2128
        %v2130 = vpop.f32.mrb[0].mxu0
        %2131 = vmatprep.mubr.bf16.mxu0 0
        %2132 = vmatmul.mubr.bf16.gmra.mrb[0].mxu0 %v2061
        %v2133 = vpop.f32.mrb[0].mxu0
        %v2134 = vadd.f32 0.0, %v2133
        %v2135 = vpop.f32.mrb[0].mxu0
        %v2136 = vpop.f32.mrb[0].mxu0
        %v2137 = vadd.f32 0.0, %v2136
        %v2138 = vpop.f32.mrb[0].mxu0
        %2139 = vmatprep.mubr.bf16.mxu0 0
        %2140 = vmatmul.mubr.bf16.gmra.mrb[0].mxu0 %v2064
        %v2141 = vpop.f32.mrb[0].mxu0
        %v2142 = vadd.f32 0.0, %v2141
        %v2143 = vpop.f32.mrb[0].mxu0
        %v2144 = vpop.f32.mrb[0].mxu0
        %v2145 = vadd.f32 0.0, %v2144
        %v2146 = vpop.f32.mrb[0].mxu0
        %2147 = vmatprep.mubr.bf16.mxu0 0
        %2148 = vmatmul.mubr.bf16.gmra.mrb[0].mxu0 %v2067
        %v2149 = vpop.f32.mrb[0].mxu0
        %v2150 = vadd.f32 0.0, %v2149
        %v2151 = vpop.f32.mrb[0].mxu0
        %v2152 = vpop.f32.mrb[0].mxu0
        %v2153 = vadd.f32 0.0, %v2152
        %v2154 = vpop.f32.mrb[0].mxu0
        %2155 = vmatprep.mubr.bf16.mxu0 0
        %2156 = vmatmul.mubr.bf16.gmra.mrb[0].mxu0 %v2070
        %v2157 = vpop.f32.mrb[0].mxu0
        %v2158 = vadd.f32 0.0, %v2157
        %v2159 = vpop.f32.mrb[0].mxu0
        %v2160 = vpop.f32.mrb[0].mxu0
        %v2161 = vadd.f32 0.0, %v2160
        %v2162 = vpop.f32.mrb[0].mxu0
        %2163 = vmatprep.mubr.bf16.mxu0 0
        %2164 = vmatmul.mubr.bf16.gmra.mrb[0].mxu0 %v2073
        %v2165 = vpop.f32.mrb[0].mxu0
        %v2166 = vadd.f32 0.0, %v2165
        %v2167 = vpop.f32.mrb[0].mxu0
        %v2168 = vpop.f32.mrb[0].mxu0
        %v2169 = vadd.f32 0.0, %v2168
        %v2170 = vpop.f32.mrb[0].mxu0
        %2171 = vdwg.mxu0
        %v2176 = vunpack.c.l.b16 %v1190
        %v2177 = vunpack.c.l.b16 %v1191
        %v2178 = vunpack.c.l.b16 %v1192
        %v2179 = vunpack.c.l.b16 %v1193
        %v2180 = vpack.c.b16 %v2177, %v2176
        %v2181 = vpack.c.b16 %v2179, %v2178
        %v2185 = vsel %vm779, %v1182, 0
        %v2188 = vsel %vm779, %v1183, 0
        %v2191 = vsel %vm779, %v1184, 0
        %v2194 = vsel %vm779, %v1185, 0
        %v2197 = vsel %vm779, %v1186, 0
        %v2200 = vsel %vm779, %v1187, 0
        %v2203 = vsel %vm779, %v1188, 0
        %v2206 = vsel %vm779, %v1189, 0
        %2208 = vmatprep.subr.bf16.mxu0 0
        %2209 = vmatpush1.bf16.msra.mxu0 %v2180
        %2210 = vmatprep.subr.bf16.mxu0 0
        %2211 = vmatpush1.bf16.msra.mxu0 %v2181
        %2212 = vmatprep.subr.bf16.mxu0 0
        %2213 = vmatpush1.bf16.msra.mxu0 0
        %2214 = vmatprep.subr.bf16.mxu0 0
        %2215 = vmatpush1.bf16.msra.mxu0 0
        %2216 = vmatprep.subr.bf16.mxu0 0
        %2217 = vmatpush1.bf16.msra.mxu0 0
        %2218 = vmatprep.subr.bf16.mxu0 0
        %2219 = vmatpush1.bf16.msra.mxu0 0
        %2220 = vmatprep.subr.bf16.mxu0 0
        %2221 = vmatpush1.bf16.msra.mxu0 0
        %2222 = vmatprep.subr.bf16.mxu0 0
        %2223 = vmatpush1.bf16.msra.mxu0 0
        %2224 = vmatprep.subr.bf16.mxu0 0
        %2225 = vmatpush1.bf16.msra.mxu0 0
        %2226 = vmatprep.subr.bf16.mxu0 0
        %2227 = vmatpush1.bf16.msra.mxu0 0
        %2228 = vmatprep.subr.bf16.mxu0 0
        %2229 = vmatpush1.bf16.msra.mxu0 0
        %2230 = vmatprep.subr.bf16.mxu0 0
        %2231 = vmatpush1.bf16.msra.mxu0 0
        %2232 = vmatprep.subr.bf16.mxu0 0
        %2233 = vmatpush1.bf16.msra.mxu0 0
        %2234 = vmatprep.subr.bf16.mxu0 0
        %2235 = vmatpush1.bf16.msra.mxu0 0
        %2236 = vmatprep.subr.bf16.mxu0 0
        %2237 = vmatpush1.bf16.msra.mxu0 0
        %2238 = vmatprep.subr.bf16.mxu0 0
        %2239 = vmatpush1.bf16.msra.mxu0 0
        %2240 = vmatprep.mubr.bf16.mxu0 0
        %2241 = vmatmul.mubr.bf16.gmra.mrb[0].mxu0 %v2185
        %v2242 = vpop.f32.mrb[0].mxu0
        %v2243 = vadd.f32 %v2110, %v2242
        %v2244 = vpop.f32.mrb[0].mxu0
        %v2245 = vpop.f32.mrb[0].mxu0
        %v2246 = vadd.f32 %v2113, %v2245
        %v2247 = vpop.f32.mrb[0].mxu0
        %2248 = vmatprep.mubr.bf16.mxu0 0
        %2249 = vmatmul.mubr.bf16.gmra.mrb[0].mxu0 %v2188
        %v2250 = vpop.f32.mrb[0].mxu0
        %v2251 = vadd.f32 %v2118, %v2250
        %v2252 = vpop.f32.mrb[0].mxu0
        %v2253 = vpop.f32.mrb[0].mxu0
        %v2254 = vadd.f32 %v2121, %v2253
        %v2255 = vpop.f32.mrb[0].mxu0
        %2256 = vmatprep.mubr.bf16.mxu0 0
        %2257 = vmatmul.mubr.bf16.gmra.mrb[0].mxu0 %v2191
        %v2258 = vpop.f32.mrb[0].mxu0
        %v2259 = vadd.f32 %v2126, %v2258
        %v2260 = vpop.f32.mrb[0].mxu0
        %v2261 = vpop.f32.mrb[0].mxu0
        %v2262 = vadd.f32 %v2129, %v2261
        %v2263 = vpop.f32.mrb[0].mxu0
        %2264 = vmatprep.mubr.bf16.mxu0 0
        %2265 = vmatmul.mubr.bf16.gmra.mrb[0].mxu0 %v2194
        %v2266 = vpop.f32.mrb[0].mxu0
        %v2267 = vadd.f32 %v2134, %v2266
        %v2268 = vpop.f32.mrb[0].mxu0
        %v2269 = vpop.f32.mrb[0].mxu0
        %v2270 = vadd.f32 %v2137, %v2269
        %v2271 = vpop.f32.mrb[0].mxu0
        %2272 = vmatprep.mubr.bf16.mxu0 0
        %2273 = vmatmul.mubr.bf16.gmra.mrb[0].mxu0 %v2197
        %v2274 = vpop.f32.mrb[0].mxu0
        %v2275 = vadd.f32 %v2142, %v2274
        %v2276 = vpop.f32.mrb[0].mxu0
        %v2277 = vpop.f32.mrb[0].mxu0
        %v2278 = vadd.f32 %v2145, %v2277
        %v2279 = vpop.f32.mrb[0].mxu0
        %2280 = vmatprep.mubr.bf16.mxu0 0
        %2281 = vmatmul.mubr.bf16.gmra.mrb[0].mxu0 %v2200
        %v2282 = vpop.f32.mrb[0].mxu0
        %v2283 = vadd.f32 %v2150, %v2282
        %v2284 = vpop.f32.mrb[0].mxu0
        %v2285 = vpop.f32.mrb[0].mxu0
        %v2286 = vadd.f32 %v2153, %v2285
        %v2287 = vpop.f32.mrb[0].mxu0
        %2288 = vmatprep.mubr.bf16.mxu0 0
        %2289 = vmatmul.mubr.bf16.gmra.mrb[0].mxu0 %v2203
        %v2290 = vpop.f32.mrb[0].mxu0
        %v2291 = vadd.f32 %v2158, %v2290
        %v2292 = vpop.f32.mrb[0].mxu0
        %v2293 = vpop.f32.mrb[0].mxu0
        %v2294 = vadd.f32 %v2161, %v2293
        %v2295 = vpop.f32.mrb[0].mxu0
        %2296 = vmatprep.mubr.bf16.mxu0 0
        %2297 = vmatmul.mubr.bf16.gmra.mrb[0].mxu0 %v2206
        %v2298 = vpop.f32.mrb[0].mxu0
        %v2299 = vadd.f32 %v2166, %v2298
        %v2300 = vpop.f32.mrb[0].mxu0
        %v2301 = vpop.f32.mrb[0].mxu0
        %v2302 = vadd.f32 %v2169, %v2301
        %v2303 = vpop.f32.mrb[0].mxu0
        %2304 = vdwg.mxu0
        %v2305 = vld [vmem:[%s4] sm:$0x1]
        %v2307 = vlaneseq
        %v2308 = vshrl.u32 %v2307, 7
        %v2309 = vsub.s32 0, %v2308
        %v2310 = vrot.slane %v2305, %v2309
        %v2312 = vadd.f32 %v2243, %v2310
        %v2313 = vadd.f32 %v2246, %v2310
        %v2314 = vadd.f32 %v2251, %v2310
        %v2315 = vadd.f32 %v2254, %v2310
        %v2316 = vadd.f32 %v2259, %v2310
        %v2317 = vadd.f32 %v2262, %v2310
        %v2318 = vadd.f32 %v2267, %v2310
        %v2319 = vadd.f32 %v2270, %v2310
        %v2320 = vadd.f32 %v2275, %v2310
        %v2321 = vadd.f32 %v2278, %v2310
        %v2322 = vadd.f32 %v2283, %v2310
        %v2323 = vadd.f32 %v2286, %v2310
        %v2324 = vadd.f32 %v2291, %v2310
        %v2325 = vadd.f32 %v2294, %v2310
        %v2326 = vadd.f32 %v2299, %v2310
        %v2327 = vadd.f32 %v2302, %v2310
        %2328 = vst [vmem:[%s245] sm:$0xff] %v2312
        %2329 = vst [vmem:[%s245 + $0x8] sm:$0xff] %v2313
        %2330 = vst [vmem:[%s245 + $0x10] sm:$0xff] %v2314
        %2331 = vst [vmem:[%s245 + $0x18] sm:$0xff] %v2315
        %2332 = vst [vmem:[%s245 + $0x20] sm:$0xff] %v2316
        %2333 = vst [vmem:[%s245 + $0x28] sm:$0xff] %v2317
        %2334 = vst [vmem:[%s245 + $0x30] sm:$0xff] %v2318
        %2335 = vst [vmem:[%s245 + $0x38] sm:$0xff] %v2319
        %2336 = vst [vmem:[%s245 + $0x40] sm:$0xff] %v2320
        %2337 = vst [vmem:[%s245 + $0x48] sm:$0xff] %v2321
        %2338 = vst [vmem:[%s245 + $0x50] sm:$0xff] %v2322
        %2339 = vst [vmem:[%s245 + $0x58] sm:$0xff] %v2323
        %2340 = vst [vmem:[%s245 + $0x60] sm:$0xff] %v2324
        %2341 = vst [vmem:[%s245 + $0x68] sm:$0xff] %v2325
        %2342 = vst [vmem:[%s245 + $0x70] sm:$0xff] %v2326
        %2343 = vst [vmem:[%s245 + $0x78] sm:$0xff] %v2327
        %s2344 = sand.u32 %s159, 1
        %s2345 = scalar_lea.sflag [#allocation3], %s2344
        %s2346 = sand.u32 %s159, 1
        %s2347 = smul.addr %s2346, 128
        %s2348 = scalar_lea.vmem [#allocation2], %s2347
        // Predicated region
        $region45: #{tpu_custom_call.1} parent=43 // pred_check
          %p2349 = pneg %p169
        $region46: #{tpu_custom_call.1} parent=43 // pred_check_branch
          %2351 = sbr.rel (%p2349) target = $region48
        $region47: #{tpu_custom_call.1} parent=43 // pred_region
          %s2352 = smul.u32 16, %s20
          %s2354 = ssub.s32 2048, 2048
          %2355 = vsyncadd %s2345, %s2354
          %s2356 = smul.addr %s2352, 128
          %s2357 = scalar_lea.hbm %s6, %s2356
          %s2358 = sshll.u32 %s2348, 4
          %s2359 = int_to_ptr.vmem [resolvable:$true] %s2358
          %2364 = dma.vmem_to_hbm [thread:$0]  %s2359, 2048, %s2357, %s2345, 128, 128, 8
        $region48: #{tpu_custom_call.1} parent=43 // pred_fallthru
          _
      $region44: #{tpu_custom_call.1} parent=5 // pred_fallthru
        _
      %p2365 = scmp.le.s32.totalorder 2, %s15
      // Predicated region
      $region49: #{tpu_custom_call.1} parent=5 // pred_check
        %p2366 = pneg %p2365
      $region50: #{tpu_custom_call.1} parent=5 // pred_check_branch
        %2368 = sbr.rel (%p2366) target = $region52
      $region51: #{tpu_custom_call.1} parent=5 // pred_region
        %s2369 = ssub.s32 %s15, 2
        // Predicated region
        $region53: #{tpu_custom_call.1} parent=51 // pred_check
          %p2370 = pneg %p175
        $region54: #{tpu_custom_call.1} parent=51 // pred_check_branch
          %2372 = sbr.rel (%p2370) target = $region56
        $region55: #{tpu_custom_call.1} parent=51 // pred_region
          %s2373 = sand.u32 %s160, 1
          %s2374 = scalar_lea.sflag [#allocation3], %s2373
          %s2375 = sand.u32 %s160, 1
          %s2376 = smul.addr %s2375, 128
          %s2377 = scalar_lea.vmem [#allocation2], %s2376
          %2378 = dma.done %s2374, 2048
        $region56: #{tpu_custom_call.1} parent=51 // pred_fallthru
          _
      $region52: #{tpu_custom_call.1} parent=5 // pred_fallthru
        _
    $region6: #{tpu_custom_call.1} parent=1 // loop_footer
      %s19 = sadd.s32 1, %s15
    $region7: #{tpu_custom_call.1} parent=1 // loop_footer_branch
      %14 = sbr.rel target = $region3
    $region8: #{tpu_custom_call.1} parent=1 // loop_exit
      _
    %2379 = vsyncpa [#allocation3], 1
    %s2380 = scalar_lea.sflag [#allocation3], 1
    %2381 = vsyncpa %s2380, 1

</llo_original>
